<compile_context>
chip_gen: v7x
topology: tpu7x:2x2x1
jax: 0.10.0
libtpu: 0.0.40
codegen_flags: <defaults>
</compile_context>

<pallas_src>
import numpy as np
import jax
import jax.numpy as jnp
from jax.experimental import pallas as pl
from jax.experimental.pallas import tpu as pltpu


def _round_up(x, m):
    return ((x + m - 1) // m) * m


# --------------------------------- kernel ----------------------------------

def cgc_kernel(xs_ref, x1_ref, x2_ref,
               w1s_ref, w11_ref, w12_ref, b1_ref,
               w2_ref, b2_ref,
               sbc_ref, eexp_ref, esum_ref,
               o_ref):
    f32 = jnp.float32
    cd = w1s_ref.dtype                         # matmul compute dtype (bf16 by default)

    xs = xs_ref[...].astype(cd)
    x1 = x1_ref[...].astype(cd)
    x2 = x2_ref[...].astype(cd)

    # Fused fc1 of all experts + all three gate projections.  Weights are split
    # per input stream so no wrapper-side concat of [xs|x1|x2] is needed.
    # Biases (including the -1e30 gate masks) are added in f32 AFTER the dots.
    h = (jnp.dot(xs, w1s_ref[...], preferred_element_type=f32)
         + jnp.dot(x1, w11_ref[...], preferred_element_type=f32)
         + jnp.dot(x2, w12_ref[...], preferred_element_type=f32)
         + b1_ref[...])                        # (TB, NE_pad + 128)

    ne = w2_ref.shape[0]                       # NE_pad (multiple of 128)
    he = jnp.maximum(h[:, :ne], 0.0)           # expert hidden + ReLU (lane-aligned slice)
    # TODO(synk): nn.Dropout(0.3) is identity in eval mode; not applied here.
    zg = h[:, ne:]                             # (TB, 128) packed gate logits

    # fc2 of every expert exactly once (block-diagonal weight, NO replication).
    e = jnp.dot(he.astype(cd), w2_ref[...], preferred_element_type=f32) + b2_ref[...]
    # e: (TB, NH_pad); e[:, n*H:(n+1)*H] is expert n's output, pad columns are 0.

    # Segmented softmax over the three gate segments.  Each segment uses its OWN
    # max as the stabilizer (masked / padded slots exp to exactly 0), so one
    # segment sitting far below another can never underflow its denominator.
    sbc = sbc_ref[...]                         # (3, 128) 0/1 segment membership, f32
    neg = jnp.float32(-1e30)
    mfull = jnp.zeros_like(zg)
    for g in range(3):
        sel = sbc[g:g + 1, :]                                        # (1, 128)
        m_g = jnp.max(jnp.where(sel > 0.5, zg, neg), axis=1, keepdims=True)
        mfull = mfull + m_g * sel
    ez = jnp.exp(zg - mfull)                   # masked / padded slots -> exactly 0
    recfull = jnp.zeros_like(zg)
    for g in range(3):
        sel = sbc[g:g + 1, :]
        d_g = jnp.sum(ez * sel, axis=1, keepdims=True)               # (TB, 1)
        r0 = pl.reciprocal(d_g, approx=True)                         # EUP vrcp (near free)
        r = r0 * (2.0 - d_g * r0)                                    # one Newton step
        recfull = recfull + r * sel
    gates = (ez * recfull).astype(cd)          # (TB, 128) normalized gate weights

    # Per-gate mixing with shared 0/1 constants (exact in bf16):
    #   gexp = gates @ eexp[g]   broadcasts gate weight n over expert n's H lanes
    #   out  = (gexp * e) @ esum sums over experts -> (TB, H_pad)
    # Each result is a full-width (multiple of 128) unmasked store.
    for g in range(3):
        gexp = jnp.dot(gates, eexp_ref[g], preferred_element_type=f32)   # (TB, NH_pad)
        mix = jnp.dot((gexp * e).astype(cd), esum_ref[...],
                      preferred_element_type=f32)                        # (TB, H_pad)
        o_ref[g, :, :] = mix


# ------------------------- host-side weight packing -------------------------

def pack_cgc_params(params, input_size, num_specific, num_shared,
                    experts_out, experts_hidden, matmul_dtype=jnp.bfloat16):
    """Pack per-expert / per-gate weights into fused, lane-padded matrices."""
    D, Eo, H = input_size, experts_out, experts_hidden
    nsp, nsh = num_specific, num_shared
    NT = 2 * nsp + nsh                    # expert order: [task1, task2, shared]
    NE = NT * Eo
    NE_pad = _round_up(NE, 128)           # expert-hidden block, lane-tile aligned
    G = 3 * NT
    Gpad = _round_up(G, 128)              # gate-logit block padded to full vregs
    P1 = NE_pad + Gpad
    NH = NT * H
    NH_pad = _round_up(NH, 128)
    H_pad = _round_up(H, 128)             # lane-dense output width
    NEG = -1.0e30

    p = {k: np.asarray(v, dtype=np.float32) for k, v in params.items()}

    # ---- fc1 + gates, split per input stream: h = xs@w1s + x1@w11 + x2@w12 + b1 ----
    w1s = np.zeros((D, P1), np.float32)   # multiplies xs: shared experts + shared gate
    w11 = np.zeros((D, P1), np.float32)   # multiplies x1: task1 experts + gate1
    w12 = np.zeros((D, P1), np.float32)   # multiplies x2: task2 experts + gate2
    b1 = np.zeros((1, P1), np.float32)

    def put_fc1(dst, n, w, b):
        dst[:, n * Eo:(n + 1) * Eo] = w
        b1[0, n * Eo:(n + 1) * Eo] = b

    for i in range(nsp):
        put_fc1(w11, i,        p['w1_t1'][i], p['b1_t1'][i, 0])
        put_fc1(w12, nsp + i,  p['w1_t2'][i], p['b1_t2'][i, 0])
    for j in range(nsh):
        put_fc1(w1s, 2 * nsp + j, p['w1_shared'][j], p['b1_shared'][j, 0])

    # Gate logits: 3 segments of NT lanes each; everything else masked to -1e30.
    b1[0, NE_pad:] = NEG
    # gate 0: task1 gate (input x1) selects [t1 experts, shared experts]
    g0 = NE_pad + 0 * NT
    w11[:, g0:g0 + nsp] = p['wg1'][:, :nsp]
    b1[0, g0:g0 + nsp] = p['bg1'][0, :nsp]
    w11[:, g0 + 2 * nsp:g0 + NT] = p['wg1'][:, nsp:]
    b1[0, g0 + 2 * nsp:g0 + NT] = p['bg1'][0, nsp:]
    # gate 1: task2 gate (input x2) selects [t2 experts, shared experts]
    g1 = NE_pad + 1 * NT
    w12[:, g1 + nsp:g1 + 2 * nsp] = p['wg2'][:, :nsp]
    b1[0, g1 + nsp:g1 + 2 * nsp] = p['bg2'][0, :nsp]
    w12[:, g1 + 2 * nsp:g1 + NT] = p['wg2'][:, nsp:]
    b1[0, g1 + 2 * nsp:g1 + NT] = p['bg2'][0, nsp:]
    # gate 2: shared gate (input xs) selects all experts [t1, t2, shared]
    g2 = NE_pad + 2 * NT
    w1s[:, g2:g2 + NT] = p['wgs']
    b1[0, g2:g2 + NT] = p['bgs'][0]

    # ---- fc2 of all experts, block-diagonal (no lane replication) ----
    w2 = np.zeros((NE_pad, NH_pad), np.float32)
    b2 = np.zeros((1, NH_pad), np.float32)

    def put_fc2(n, w, b):
        w2[n * Eo:(n + 1) * Eo, n * H:(n + 1) * H] = w
        b2[0, n * H:(n + 1) * H] = b

    for i in range(nsp):
        put_fc2(i,       p['w2_t1'][i], p['b2_t1'][i, 0])
        put_fc2(nsp + i, p['w2_t2'][i], p['b2_t2'][i, 0])
    for j in range(nsh):
        put_fc2(2 * nsp + j, p['w2_shared'][j], p['b2_shared'][j, 0])

    # ---- 0/1 constants: segment membership, gate->H broadcast, expert sum ----
    sbc = np.zeros((3, Gpad), np.float32)
    for g in range(3):
        sbc[g, g * NT:(g + 1) * NT] = 1.0
    eexp = np.zeros((3, Gpad, NH_pad), np.float32)
    for g in range(3):
        for n in range(NT):
            eexp[g, g * NT + n, n * H:(n + 1) * H] = 1.0
    esum = np.zeros((NH_pad, H_pad), np.float32)
    for n in range(NT):
        esum[n * H:(n + 1) * H, :H] = np.eye(H, dtype=np.float32)

    cd = matmul_dtype
    return dict(
        w1s=jnp.asarray(w1s, cd), w11=jnp.asarray(w11, cd), w12=jnp.asarray(w12, cd),
        b1=jnp.asarray(b1, jnp.float32),
        w2=jnp.asarray(w2, cd), b2=jnp.asarray(b2, jnp.float32),
        sbc=jnp.asarray(sbc, jnp.float32),
        eexp=jnp.asarray(eexp, cd), esum=jnp.asarray(esum, cd),
        D=D, H=H, H_pad=H_pad,
    )


# --------------------------------- wrapper ----------------------------------

def _tensorcores_per_chip():
    """v7x has 2 TensorCores per chip; v5e/v6e have 1 (default to 1 if unknown)."""
    try:
        kind = jax.devices()[0].device_kind.lower()
    except Exception:
        return 1
    return 2 if ("v7" in kind or "7x" in kind) else 1


def _choose_batch_tile(B, n_cores, max_tb=1024):
    tb = B
    # v7x: give the 'parallel' grid >= 2 steps so both TensorCores get work.
    if n_cores >= 2 and B >= 16 and B % 16 == 0:
        tb = B // 2
    # Single-TC chips (v5e/v6e): the grid is a sequential loop, so keep one big
    # tile and only split when it would outgrow the (raised) VMEM budget.
    while tb > max_tb and tb % 16 == 0:
        tb //= 2
    return tb


def cgc_forward(inputs, packed, if_last=False):
    xs, x1, x2 = (jnp.asarray(t, jnp.float32) for t in inputs)
    B, D = xs.shape
    H, H_pad = packed['H'], packed['H_pad']

    n_cores = _tensorcores_per_chip()
    TB = _choose_batch_tile(B, n_cores)
    grid = (B // TB,)

    weights = [packed['w1s'], packed['w11'], packed['w12'], packed['b1'],
               packed['w2'], packed['b2'], packed['sbc'],
               packed['eexp'], packed['esum']]

    # Constants use a fixed block index, so Pallas does not re-DMA them across
    # grid steps.  (Single-buffering them via pl.Buffered(1) is a further VMEM
    # saving on v7x, but their footprint here is tiny.)
    def const_spec(a):
        nd = a.ndim
        return pl.BlockSpec(a.shape, lambda i, _n=nd: (0,) * _n)

    x_spec = pl.BlockSpec((TB, D), lambda i: (i, 0))
    in_specs = [x_spec, x_spec, x_spec] + [const_spec(a) for a in weights]
    # Lane-dense output: (3 gates, B, H_pad) with H_pad a multiple of 128.
    out_spec = pl.BlockSpec((3, TB, H_pad), lambda i: (0, i, 0))
    out_shape = jax.ShapeDtypeStruct((3, B, H_pad), jnp.float32)

    # v7x has 64 MiB VMEM per TensorCore; v5e/v6e have 128 MiB on their single core.
    vmem_limit = (48 << 20) if n_cores >= 2 else (100 << 20)

    out = pl.pallas_call(
        cgc_kernel,
        grid=grid,
        in_specs=in_specs,
        out_specs=out_spec,
        out_shape=out_shape,
        compiler_params=pltpu.CompilerParams(
            dimension_semantics=("parallel",),
            vmem_limit_bytes=vmem_limit),
    )(xs, x1, x2, *weights)

    o1 = out[0, :, :H]     # gate_task1_out
    o2 = out[1, :, :H]     # gate_task2_out
    osh = out[2, :, :H]    # gate_shared_out
    if if_last:
        return [o1, o2]
    return [osh, o1, o2]


# ---------- parameter construction (deterministic, torch-Linear-style init) ----------

def init_linear(key, fan_in, fan_out):
    kw, kb = jax.random.split(key)
    bound = 1.0 / float(fan_in) ** 0.5
    w = jax.random.uniform(kw, (fan_in, fan_out), jnp.float32, -bound, bound)
    b = jax.random.uniform(kb, (fan_out,), jnp.float32, -bound, bound)
    return w, b


def init_expert_group(key, n_experts, input_size, experts_out, experts_hidden):
    w1s, b1s, w2s, b2s = [], [], [], []
    keys = jax.random.split(key, n_experts)
    for k in keys:
        k1, k2 = jax.random.split(k)
        w1, b1 = init_linear(k1, input_size, experts_out)      # fc1
        w2, b2 = init_linear(k2, experts_out, experts_hidden)  # fc2
        w1s.append(w1); b1s.append(b1[None, :])
        w2s.append(w2); b2s.append(b2[None, :])
    return (jnp.stack(w1s), jnp.stack(b1s), jnp.stack(w2s), jnp.stack(b2s))


def make_cgc_params(key, input_size, num_specific, num_shared, experts_out, experts_hidden):
    ks = jax.random.split(key, 6)
    w1_sh, b1_sh, w2_sh, b2_sh = init_expert_group(ks[0], num_shared, input_size,
                                                   experts_out, experts_hidden)
    w1_t1, b1_t1, w2_t1, b2_t1 = init_expert_group(ks[1], num_specific, input_size,
                                                   experts_out, experts_hidden)
    w1_t2, b1_t2, w2_t2, b2_t2 = init_expert_group(ks[2], num_specific, input_size,
                                                   experts_out, experts_hidden)
    wg1, bg1 = init_linear(ks[3], input_size, num_specific + num_shared)
    wg2, bg2 = init_linear(ks[4], input_size, num_specific + num_shared)
    wgs, bgs = init_linear(ks[5], input_size, 2 * num_specific + num_shared)
    return dict(
        w1_shared=w1_sh, b1_shared=b1_sh, w2_shared=w2_sh, b2_shared=b2_sh,
        w1_t1=w1_t1, b1_t1=b1_t1, w2_t1=w2_t1, b2_t1=b2_t1,
        w1_t2=w1_t2, b1_t2=b1_t2, w2_t2=w2_t2, b2_t2=b2_t2,
        wg1=wg1, bg1=bg1[None, :], wg2=wg2, bg2=bg2[None, :],
        wgs=wgs, bgs=bgs[None, :],
    )


# ---------- pure-JAX reference (mirrors the PyTorch forward, eval mode) ----------

def cgc_ref(inputs, params, if_last=False):
    xs, x1, x2 = inputs

    def expert_group(x, w1, b1, w2, b2):
        h = jnp.maximum(jnp.einsum('bd,nde->nbe', x, w1) + b1, 0.0)
        return jnp.einsum('nbe,neh->nbh', h, w2) + b2

    sh = expert_group(xs, params['w1_shared'], params['b1_shared'],
                      params['w2_shared'], params['b2_shared'])
    t1 = expert_group(x1, params['w1_t1'], params['b1_t1'],
                      params['w2_t1'], params['b2_t1'])
    t2 = expert_group(x2, params['w1_t2'], params['b1_t2'],
                      params['w2_t2'], params['b2_t2'])

    def gate(x, w, b):
        return jax.nn.softmax(x @ w + b, axis=1)

    g1 = gate(x1, params['wg1'], params['bg1'])
    g2 = gate(x2, params['wg2'], params['bg2'])
    gs = gate(xs, params['wgs'], params['bgs'])

    out1 = jnp.einsum('abc,ba->bc', jnp.concatenate([t1, sh], axis=0), g1)
    out2 = jnp.einsum('abc,ba->bc', jnp.concatenate([t2, sh], axis=0), g2)
    outs = jnp.einsum('abc,ba->bc', jnp.concatenate([t1, t2, sh], axis=0), gs)
    if if_last:
        return [out1, out2]
    return [outs, out1, out2]


if __name__ == "__main__":
    B = 8
    input_size = 32
    num_specific_experts = 2
    num_shared_experts = 2
    experts_out = 16      # expert fc1 (hidden) width
    experts_hidden = 24   # expert fc2 (output) width
    if_last = False

    key = jax.random.PRNGKey(0)
    kp, kxs, kx1, kx2 = jax.random.split(key, 4)
    params = make_cgc_params(kp, input_size, num_specific_experts,
                             num_shared_experts, experts_out, experts_hidden)
    packed = pack_cgc_params(params, input_size, num_specific_experts,
                             num_shared_experts, experts_out, experts_hidden)

    xs = jax.random.normal(kxs, (B, input_size), jnp.float32)
    x1 = jax.random.normal(kx1, (B, input_size), jnp.float32)
    x2 = jax.random.normal(kx2, (B, input_size), jnp.float32)
    inputs = (xs, x1, x2)

    outs = cgc_forward(inputs, packed, if_last=if_last)
    outs = [jax.block_until_ready(o) for o in outs]

    refs = cgc_ref(inputs, params, if_last=if_last)
    for o, r in zip(outs, refs):
        assert o.shape == r.shape and o.dtype == r.dtype
        # bf16 matmul inputs (f32 accumulation / biases / softmax) vs f32 reference:
        # compare at bf16-level tolerance.
        assert jnp.allclose(o, r, rtol=2e-2, atol=2e-2), "mismatch vs reference"

    print("KERNEL_OK")
</pallas_src>

<mosaic_0001>
module attributes {stable_mosaic.version = 11 : i64} {
  func.func @cgc_kernel(%arg0: i32, %arg1: memref<8x32xf32, #tpu.memory_space<vmem>>, %arg2: memref<8x32xf32, #tpu.memory_space<vmem>>, %arg3: memref<8x32xf32, #tpu.memory_space<vmem>>, %arg4: memref<32x256xbf16, #tpu.memory_space<vmem>>, %arg5: memref<32x256xbf16, #tpu.memory_space<vmem>>, %arg6: memref<32x256xbf16, #tpu.memory_space<vmem>>, %arg7: memref<1x256xf32, #tpu.memory_space<vmem>>, %arg8: memref<128x256xbf16, #tpu.memory_space<vmem>>, %arg9: memref<1x256xf32, #tpu.memory_space<vmem>>, %arg10: memref<3x128xf32, #tpu.memory_space<vmem>>, %arg11: memref<3x128x256xbf16, #tpu.memory_space<vmem>>, %arg12: memref<256x128xbf16, #tpu.memory_space<vmem>>, %arg13: memref<3x8x128xf32, #tpu.memory_space<vmem>>) attributes {dimension_semantics = [#tpu.dimension_semantics<parallel>], iteration_bounds = array<i64: 1>, scalar_prefetch = 0 : i64, scratch_operands = 0 : i64, tpu.core_type = #tpu.core_type<tc>, window_params = [{transform_indices = @transform_0, window_bounds = array<i64: 8, 32>}, {transform_indices = @transform_1, window_bounds = array<i64: 8, 32>}, {transform_indices = @transform_2, window_bounds = array<i64: 8, 32>}, {pipeline_mode = #tpu.pipeline_mode<synchronous>, transform_indices = @transform_3, window_bounds = array<i64: 32, 256>}, {pipeline_mode = #tpu.pipeline_mode<synchronous>, transform_indices = @transform_4, window_bounds = array<i64: 32, 256>}, {pipeline_mode = #tpu.pipeline_mode<synchronous>, transform_indices = @transform_5, window_bounds = array<i64: 32, 256>}, {pipeline_mode = #tpu.pipeline_mode<synchronous>, transform_indices = @transform_6, window_bounds = array<i64: 1, 256>}, {pipeline_mode = #tpu.pipeline_mode<synchronous>, transform_indices = @transform_7, window_bounds = array<i64: 128, 256>}, {pipeline_mode = #tpu.pipeline_mode<synchronous>, transform_indices = @transform_8, window_bounds = array<i64: 1, 256>}, {pipeline_mode = #tpu.pipeline_mode<synchronous>, transform_indices = @transform_9, window_bounds = array<i64: 3, 128>}, {pipeline_mode = #tpu.pipeline_mode<synchronous>, transform_indices = @transform_10, window_bounds = array<i64: 3, 128, 256>}, {pipeline_mode = #tpu.pipeline_mode<synchronous>, transform_indices = @transform_11, window_bounds = array<i64: 256, 128>}, {transform_indices = @transform_12, window_bounds = array<i64: 3, 8, 128>}]} {
    %c0 = arith.constant 0 : index
    %c0_0 = arith.constant 0 : index
    %0 = vector.load %arg1[%c0, %c0_0] : memref<8x32xf32, #tpu.memory_space<vmem>>, vector<8x32xf32>
    %1 = arith.truncf %0 : vector<8x32xf32> to vector<8x32xbf16>
    %c0_1 = arith.constant 0 : index
    %c0_2 = arith.constant 0 : index
    %2 = vector.load %arg2[%c0_1, %c0_2] : memref<8x32xf32, #tpu.memory_space<vmem>>, vector<8x32xf32>
    %3 = arith.truncf %2 : vector<8x32xf32> to vector<8x32xbf16>
    %c0_3 = arith.constant 0 : index
    %c0_4 = arith.constant 0 : index
    %4 = vector.load %arg3[%c0_3, %c0_4] : memref<8x32xf32, #tpu.memory_space<vmem>>, vector<8x32xf32>
    %5 = arith.truncf %4 : vector<8x32xf32> to vector<8x32xbf16>
    %c0_5 = arith.constant 0 : index
    %c0_6 = arith.constant 0 : index
    %6 = vector.load %arg4[%c0_5, %c0_6] : memref<32x256xbf16, #tpu.memory_space<vmem>>, vector<32x256xbf16>
    %cst = arith.constant dense<0.000000e+00> : vector<8x256xf32>
    %7 = tpu.matmul %1, %6, %cst {dimension_numbers = #tpu.dot_dimension_numbers<[1], [0], [0], [1], [0, 0, 1, 1], [], []>} : vector<8x32xbf16>, vector<32x256xbf16>, vector<8x256xf32> -> vector<8x256xf32>
    %c0_7 = arith.constant 0 : index
    %c0_8 = arith.constant 0 : index
    %8 = vector.load %arg5[%c0_7, %c0_8] : memref<32x256xbf16, #tpu.memory_space<vmem>>, vector<32x256xbf16>
    %cst_9 = arith.constant dense<0.000000e+00> : vector<8x256xf32>
    %9 = tpu.matmul %3, %8, %cst_9 {dimension_numbers = #tpu.dot_dimension_numbers<[1], [0], [0], [1], [0, 0, 1, 1], [], []>} : vector<8x32xbf16>, vector<32x256xbf16>, vector<8x256xf32> -> vector<8x256xf32>
    %10 = arith.addf %7, %9 : vector<8x256xf32>
    %c0_10 = arith.constant 0 : index
    %c0_11 = arith.constant 0 : index
    %11 = vector.load %arg6[%c0_10, %c0_11] : memref<32x256xbf16, #tpu.memory_space<vmem>>, vector<32x256xbf16>
    %cst_12 = arith.constant dense<0.000000e+00> : vector<8x256xf32>
    %12 = tpu.matmul %5, %11, %cst_12 {dimension_numbers = #tpu.dot_dimension_numbers<[1], [0], [0], [1], [0, 0, 1, 1], [], []>} : vector<8x32xbf16>, vector<32x256xbf16>, vector<8x256xf32> -> vector<8x256xf32>
    %13 = arith.addf %10, %12 : vector<8x256xf32>
    %c0_13 = arith.constant 0 : index
    %c0_14 = arith.constant 0 : index
    %14 = vector.load %arg7[%c0_13, %c0_14] : memref<1x256xf32, #tpu.memory_space<vmem>>, vector<1x256xf32>
    %15 = vector.broadcast %14 : vector<1x256xf32> to vector<8x256xf32>
    %16 = arith.addf %13, %15 : vector<8x256xf32>
    %17 = vector.extract_strided_slice %16 {offsets = [0, 0], sizes = [8, 128], strides = [1, 1]} : vector<8x256xf32> to vector<8x128xf32>
    %cst_15 = arith.constant 0.000000e+00 : f32
    %18 = vector.broadcast %cst_15 : f32 to vector<8x128xf32>
    %19 = arith.maximumf %17, %18 : vector<8x128xf32>
    %20 = vector.extract_strided_slice %16 {offsets = [0, 128], sizes = [8, 128], strides = [1, 1]} : vector<8x256xf32> to vector<8x128xf32>
    %21 = arith.truncf %19 : vector<8x128xf32> to vector<8x128xbf16>
    %c0_16 = arith.constant 0 : index
    %c0_17 = arith.constant 0 : index
    %22 = vector.load %arg8[%c0_16, %c0_17] : memref<128x256xbf16, #tpu.memory_space<vmem>>, vector<128x256xbf16>
    %cst_18 = arith.constant dense<0.000000e+00> : vector<8x256xf32>
    %23 = tpu.matmul %21, %22, %cst_18 {dimension_numbers = #tpu.dot_dimension_numbers<[1], [0], [0], [1], [0, 0, 1, 1], [], []>} : vector<8x128xbf16>, vector<128x256xbf16>, vector<8x256xf32> -> vector<8x256xf32>
    %c0_19 = arith.constant 0 : index
    %c0_20 = arith.constant 0 : index
    %24 = vector.load %arg9[%c0_19, %c0_20] : memref<1x256xf32, #tpu.memory_space<vmem>>, vector<1x256xf32>
    %25 = vector.broadcast %24 : vector<1x256xf32> to vector<8x256xf32>
    %26 = arith.addf %23, %25 : vector<8x256xf32>
    %c0_21 = arith.constant 0 : index
    %c0_22 = arith.constant 0 : index
    %27 = vector.load %arg10[%c0_21, %c0_22] : memref<3x128xf32, #tpu.memory_space<vmem>>, vector<3x128xf32>
    %cst_23 = arith.constant 0.000000e+00 : f32
    %28 = vector.broadcast %cst_23 : f32 to vector<8x128xf32>
    %29 = vector.extract_strided_slice %27 {offsets = [0, 0], sizes = [1, 128], strides = [1, 1]} : vector<3x128xf32> to vector<1x128xf32>
    %cst_24 = arith.constant 5.000000e-01 : f32
    %30 = vector.broadcast %cst_24 : f32 to vector<1x128xf32>
    %31 = arith.cmpf ogt, %29, %30 : vector<1x128xf32>
    %cst_25 = arith.constant -1.000000e+30 : f32
    %32 = vector.shape_cast %31 : vector<1x128xi1> to vector<1x128xi1>
    %33 = vector.broadcast %32 : vector<1x128xi1> to vector<8x128xi1>
    %34 = vector.broadcast %cst_25 : f32 to vector<8x128xf32>
    %35 = arith.select %33, %20, %34 : vector<8x128xi1>, vector<8x128xf32>
    %cst_26 = arith.constant dense<0xFF800000> : vector<8xf32>
    %36 = vector.multi_reduction <maximumf>, %35, %cst_26 [1] : vector<8x128xf32> to vector<8xf32>
    %37 = vector.shape_cast %36 : vector<8xf32> to vector<8x1xf32>
    %38 = vector.broadcast %37 : vector<8x1xf32> to vector<8x128xf32>
    %39 = vector.broadcast %29 : vector<1x128xf32> to vector<8x128xf32>
    %40 = arith.mulf %38, %39 : vector<8x128xf32>
    %41 = arith.addf %28, %40 : vector<8x128xf32>
    %42 = vector.extract_strided_slice %27 {offsets = [1, 0], sizes = [1, 128], strides = [1, 1]} : vector<3x128xf32> to vector<1x128xf32>
    %cst_27 = arith.constant 5.000000e-01 : f32
    %43 = vector.broadcast %cst_27 : f32 to vector<1x128xf32>
    %44 = arith.cmpf ogt, %42, %43 : vector<1x128xf32>
    %cst_28 = arith.constant -1.000000e+30 : f32
    %45 = vector.shape_cast %44 : vector<1x128xi1> to vector<1x128xi1>
    %46 = vector.broadcast %45 : vector<1x128xi1> to vector<8x128xi1>
    %47 = vector.broadcast %cst_28 : f32 to vector<8x128xf32>
    %48 = arith.select %46, %20, %47 : vector<8x128xi1>, vector<8x128xf32>
    %cst_29 = arith.constant dense<0xFF800000> : vector<8xf32>
    %49 = vector.multi_reduction <maximumf>, %48, %cst_29 [1] : vector<8x128xf32> to vector<8xf32>
    %50 = vector.shape_cast %49 : vector<8xf32> to vector<8x1xf32>
    %51 = vector.broadcast %50 : vector<8x1xf32> to vector<8x128xf32>
    %52 = vector.broadcast %42 : vector<1x128xf32> to vector<8x128xf32>
    %53 = arith.mulf %51, %52 : vector<8x128xf32>
    %54 = arith.addf %41, %53 : vector<8x128xf32>
    %55 = vector.extract_strided_slice %27 {offsets = [2, 0], sizes = [1, 128], strides = [1, 1]} : vector<3x128xf32> to vector<1x128xf32>
    %cst_30 = arith.constant 5.000000e-01 : f32
    %56 = vector.broadcast %cst_30 : f32 to vector<1x128xf32>
    %57 = arith.cmpf ogt, %55, %56 : vector<1x128xf32>
    %cst_31 = arith.constant -1.000000e+30 : f32
    %58 = vector.shape_cast %57 : vector<1x128xi1> to vector<1x128xi1>
    %59 = vector.broadcast %58 : vector<1x128xi1> to vector<8x128xi1>
    %60 = vector.broadcast %cst_31 : f32 to vector<8x128xf32>
    %61 = arith.select %59, %20, %60 : vector<8x128xi1>, vector<8x128xf32>
    %cst_32 = arith.constant dense<0xFF800000> : vector<8xf32>
    %62 = vector.multi_reduction <maximumf>, %61, %cst_32 [1] : vector<8x128xf32> to vector<8xf32>
    %63 = vector.shape_cast %62 : vector<8xf32> to vector<8x1xf32>
    %64 = vector.broadcast %63 : vector<8x1xf32> to vector<8x128xf32>
    %65 = vector.broadcast %55 : vector<1x128xf32> to vector<8x128xf32>
    %66 = arith.mulf %64, %65 : vector<8x128xf32>
    %67 = arith.addf %54, %66 : vector<8x128xf32>
    %68 = arith.subf %20, %67 : vector<8x128xf32>
    %69 = math.exp %68 : vector<8x128xf32>
    %cst_33 = arith.constant 0.000000e+00 : f32
    %70 = vector.broadcast %cst_33 : f32 to vector<8x128xf32>
    %71 = vector.extract_strided_slice %27 {offsets = [0, 0], sizes = [1, 128], strides = [1, 1]} : vector<3x128xf32> to vector<1x128xf32>
    %72 = vector.broadcast %71 : vector<1x128xf32> to vector<8x128xf32>
    %73 = arith.mulf %69, %72 : vector<8x128xf32>
    %cst_34 = arith.constant dense<0.000000e+00> : vector<8xf32>
    %74 = vector.multi_reduction <add>, %73, %cst_34 [1] : vector<8x128xf32> to vector<8xf32>
    %75 = vector.shape_cast %74 : vector<8xf32> to vector<8x1xf32>
    %76 = tpu.reciprocal %75 {approx = true} : vector<8x1xf32> -> vector<8x1xf32>
    %77 = arith.mulf %75, %76 : vector<8x1xf32>
    %cst_35 = arith.constant 2.000000e+00 : f32
    %78 = vector.broadcast %cst_35 : f32 to vector<8x1xf32>
    %79 = arith.subf %78, %77 : vector<8x1xf32>
    %80 = arith.mulf %76, %79 : vector<8x1xf32>
    %81 = vector.broadcast %80 : vector<8x1xf32> to vector<8x128xf32>
    %82 = vector.broadcast %71 : vector<1x128xf32> to vector<8x128xf32>
    %83 = arith.mulf %81, %82 : vector<8x128xf32>
    %84 = arith.addf %70, %83 : vector<8x128xf32>
    %85 = vector.extract_strided_slice %27 {offsets = [1, 0], sizes = [1, 128], strides = [1, 1]} : vector<3x128xf32> to vector<1x128xf32>
    %86 = vector.broadcast %85 : vector<1x128xf32> to vector<8x128xf32>
    %87 = arith.mulf %69, %86 : vector<8x128xf32>
    %cst_36 = arith.constant dense<0.000000e+00> : vector<8xf32>
    %88 = vector.multi_reduction <add>, %87, %cst_36 [1] : vector<8x128xf32> to vector<8xf32>
    %89 = vector.shape_cast %88 : vector<8xf32> to vector<8x1xf32>
    %90 = tpu.reciprocal %89 {approx = true} : vector<8x1xf32> -> vector<8x1xf32>
    %91 = arith.mulf %89, %90 : vector<8x1xf32>
    %cst_37 = arith.constant 2.000000e+00 : f32
    %92 = vector.broadcast %cst_37 : f32 to vector<8x1xf32>
    %93 = arith.subf %92, %91 : vector<8x1xf32>
    %94 = arith.mulf %90, %93 : vector<8x1xf32>
    %95 = vector.broadcast %94 : vector<8x1xf32> to vector<8x128xf32>
    %96 = vector.broadcast %85 : vector<1x128xf32> to vector<8x128xf32>
    %97 = arith.mulf %95, %96 : vector<8x128xf32>
    %98 = arith.addf %84, %97 : vector<8x128xf32>
    %99 = vector.extract_strided_slice %27 {offsets = [2, 0], sizes = [1, 128], strides = [1, 1]} : vector<3x128xf32> to vector<1x128xf32>
    %100 = vector.broadcast %99 : vector<1x128xf32> to vector<8x128xf32>
    %101 = arith.mulf %69, %100 : vector<8x128xf32>
    %cst_38 = arith.constant dense<0.000000e+00> : vector<8xf32>
    %102 = vector.multi_reduction <add>, %101, %cst_38 [1] : vector<8x128xf32> to vector<8xf32>
    %103 = vector.shape_cast %102 : vector<8xf32> to vector<8x1xf32>
    %104 = tpu.reciprocal %103 {approx = true} : vector<8x1xf32> -> vector<8x1xf32>
    %105 = arith.mulf %103, %104 : vector<8x1xf32>
    %cst_39 = arith.constant 2.000000e+00 : f32
    %106 = vector.broadcast %cst_39 : f32 to vector<8x1xf32>
    %107 = arith.subf %106, %105 : vector<8x1xf32>
    %108 = arith.mulf %104, %107 : vector<8x1xf32>
    %109 = vector.broadcast %108 : vector<8x1xf32> to vector<8x128xf32>
    %110 = vector.broadcast %99 : vector<1x128xf32> to vector<8x128xf32>
    %111 = arith.mulf %109, %110 : vector<8x128xf32>
    %112 = arith.addf %98, %111 : vector<8x128xf32>
    %113 = arith.mulf %69, %112 : vector<8x128xf32>
    %114 = arith.truncf %113 : vector<8x128xf32> to vector<8x128xbf16>
    %c0_40 = arith.constant 0 : index
    %c0_41 = arith.constant 0 : index
    %c0_42 = arith.constant 0 : index
    %115 = vector.load %arg11[%c0_40, %c0_41, %c0_42] : memref<3x128x256xbf16, #tpu.memory_space<vmem>>, vector<1x128x256xbf16>
    %116 = vector.shape_cast %115 : vector<1x128x256xbf16> to vector<128x256xbf16>
    %cst_43 = arith.constant dense<0.000000e+00> : vector<8x256xf32>
    %117 = tpu.matmul %114, %116, %cst_43 {dimension_numbers = #tpu.dot_dimension_numbers<[1], [0], [0], [1], [0, 0, 1, 1], [], []>} : vector<8x128xbf16>, vector<128x256xbf16>, vector<8x256xf32> -> vector<8x256xf32>
    %118 = arith.mulf %117, %26 : vector<8x256xf32>
    %119 = arith.truncf %118 : vector<8x256xf32> to vector<8x256xbf16>
    %c0_44 = arith.constant 0 : index
    %c0_45 = arith.constant 0 : index
    %120 = vector.load %arg12[%c0_44, %c0_45] : memref<256x128xbf16, #tpu.memory_space<vmem>>, vector<256x128xbf16>
    %cst_46 = arith.constant dense<0.000000e+00> : vector<8x128xf32>
    %121 = tpu.matmul %119, %120, %cst_46 {dimension_numbers = #tpu.dot_dimension_numbers<[1], [0], [0], [1], [0, 0, 1, 1], [], []>} : vector<8x256xbf16>, vector<256x128xbf16>, vector<8x128xf32> -> vector<8x128xf32>
    %c0_47 = arith.constant 0 : index
    %c0_48 = arith.constant 0 : index
    %c0_49 = arith.constant 0 : index
    %122 = vector.load %arg13[%c0_47, %c0_48, %c0_49] : memref<3x8x128xf32, #tpu.memory_space<vmem>>, vector<1x8x128xf32>
    %123 = vector.shape_cast %122 : vector<1x8x128xf32> to vector<8x128xf32>
    %124 = vector.shape_cast %121 : vector<8x128xf32> to vector<1x8x128xf32>
    tpu.vector_store %arg13[%c0_47, %c0_48, %c0_49], %124 {strides = array<i32>} : memref<3x8x128xf32, #tpu.memory_space<vmem>>, vector<1x8x128xf32>,
    %c1 = arith.constant 1 : index
    %c0_50 = arith.constant 0 : index
    %c0_51 = arith.constant 0 : index
    %125 = vector.load %arg11[%c1, %c0_50, %c0_51] : memref<3x128x256xbf16, #tpu.memory_space<vmem>>, vector<1x128x256xbf16>
    %126 = vector.shape_cast %125 : vector<1x128x256xbf16> to vector<128x256xbf16>
    %cst_52 = arith.constant dense<0.000000e+00> : vector<8x256xf32>
    %127 = tpu.matmul %114, %126, %cst_52 {dimension_numbers = #tpu.dot_dimension_numbers<[1], [0], [0], [1], [0, 0, 1, 1], [], []>} : vector<8x128xbf16>, vector<128x256xbf16>, vector<8x256xf32> -> vector<8x256xf32>
    %128 = arith.mulf %127, %26 : vector<8x256xf32>
    %129 = arith.truncf %128 : vector<8x256xf32> to vector<8x256xbf16>
    %c0_53 = arith.constant 0 : index
    %c0_54 = arith.constant 0 : index
    %130 = vector.load %arg12[%c0_53, %c0_54] : memref<256x128xbf16, #tpu.memory_space<vmem>>, vector<256x128xbf16>
    %cst_55 = arith.constant dense<0.000000e+00> : vector<8x128xf32>
    %131 = tpu.matmul %129, %130, %cst_55 {dimension_numbers = #tpu.dot_dimension_numbers<[1], [0], [0], [1], [0, 0, 1, 1], [], []>} : vector<8x256xbf16>, vector<256x128xbf16>, vector<8x128xf32> -> vector<8x128xf32>
    %c1_56 = arith.constant 1 : index
    %c0_57 = arith.constant 0 : index
    %c0_58 = arith.constant 0 : index
    %132 = vector.load %arg13[%c1_56, %c0_57, %c0_58] : memref<3x8x128xf32, #tpu.memory_space<vmem>>, vector<1x8x128xf32>
    %133 = vector.shape_cast %132 : vector<1x8x128xf32> to vector<8x128xf32>
    %134 = vector.shape_cast %131 : vector<8x128xf32> to vector<1x8x128xf32>
    tpu.vector_store %arg13[%c1_56, %c0_57, %c0_58], %134 {strides = array<i32>} : memref<3x8x128xf32, #tpu.memory_space<vmem>>, vector<1x8x128xf32>,
    %c2 = arith.constant 2 : index
    %c0_59 = arith.constant 0 : index
    %c0_60 = arith.constant 0 : index
    %135 = vector.load %arg11[%c2, %c0_59, %c0_60] : memref<3x128x256xbf16, #tpu.memory_space<vmem>>, vector<1x128x256xbf16>
    %136 = vector.shape_cast %135 : vector<1x128x256xbf16> to vector<128x256xbf16>
    %cst_61 = arith.constant dense<0.000000e+00> : vector<8x256xf32>
    %137 = tpu.matmul %114, %136, %cst_61 {dimension_numbers = #tpu.dot_dimension_numbers<[1], [0], [0], [1], [0, 0, 1, 1], [], []>} : vector<8x128xbf16>, vector<128x256xbf16>, vector<8x256xf32> -> vector<8x256xf32>
    %138 = arith.mulf %137, %26 : vector<8x256xf32>
    %139 = arith.truncf %138 : vector<8x256xf32> to vector<8x256xbf16>
    %c0_62 = arith.constant 0 : index
    %c0_63 = arith.constant 0 : index
    %140 = vector.load %arg12[%c0_62, %c0_63] : memref<256x128xbf16, #tpu.memory_space<vmem>>, vector<256x128xbf16>
    %cst_64 = arith.constant dense<0.000000e+00> : vector<8x128xf32>
    %141 = tpu.matmul %139, %140, %cst_64 {dimension_numbers = #tpu.dot_dimension_numbers<[1], [0], [0], [1], [0, 0, 1, 1], [], []>} : vector<8x256xbf16>, vector<256x128xbf16>, vector<8x128xf32> -> vector<8x128xf32>
    %c2_65 = arith.constant 2 : index
    %c0_66 = arith.constant 0 : index
    %c0_67 = arith.constant 0 : index
    %142 = vector.load %arg13[%c2_65, %c0_66, %c0_67] : memref<3x8x128xf32, #tpu.memory_space<vmem>>, vector<1x8x128xf32>
    %143 = vector.shape_cast %142 : vector<1x8x128xf32> to vector<8x128xf32>
    %144 = vector.shape_cast %141 : vector<8x128xf32> to vector<1x8x128xf32>
    tpu.vector_store %arg13[%c2_65, %c0_66, %c0_67], %144 {strides = array<i32>} : memref<3x8x128xf32, #tpu.memory_space<vmem>>, vector<1x8x128xf32>,
    return
  }
  func.func @transform_0(%arg0: i32) -> (i32, i32) {
    %c0_i32 = arith.constant 0 : i32
    %c0_i32_0 = arith.constant 0 : i32
    return %arg0, %c0_i32 : i32, i32
  }
  func.func @transform_1(%arg0: i32) -> (i32, i32) {
    %c0_i32 = arith.constant 0 : i32
    %c0_i32_0 = arith.constant 0 : i32
    return %arg0, %c0_i32 : i32, i32
  }
  func.func @transform_2(%arg0: i32) -> (i32, i32) {
    %c0_i32 = arith.constant 0 : i32
    %c0_i32_0 = arith.constant 0 : i32
    return %arg0, %c0_i32 : i32, i32
  }
  func.func @transform_3(%arg0: i32) -> (i32, i32) {
    %c0_i32 = arith.constant 0 : i32
    %c0_i32_0 = arith.constant 0 : i32
    %c0_i32_1 = arith.constant 0 : i32
    return %c0_i32, %c0_i32_0 : i32, i32
  }
  func.func @transform_4(%arg0: i32) -> (i32, i32) {
    %c0_i32 = arith.constant 0 : i32
    %c0_i32_0 = arith.constant 0 : i32
    %c0_i32_1 = arith.constant 0 : i32
    return %c0_i32, %c0_i32_0 : i32, i32
  }
  func.func @transform_5(%arg0: i32) -> (i32, i32) {
    %c0_i32 = arith.constant 0 : i32
    %c0_i32_0 = arith.constant 0 : i32
    %c0_i32_1 = arith.constant 0 : i32
    return %c0_i32, %c0_i32_0 : i32, i32
  }
  func.func @transform_6(%arg0: i32) -> (i32, i32) {
    %c0_i32 = arith.constant 0 : i32
    %c0_i32_0 = arith.constant 0 : i32
    %c0_i32_1 = arith.constant 0 : i32
    return %c0_i32, %c0_i32_0 : i32, i32
  }
  func.func @transform_7(%arg0: i32) -> (i32, i32) {
    %c0_i32 = arith.constant 0 : i32
    %c0_i32_0 = arith.constant 0 : i32
    %c0_i32_1 = arith.constant 0 : i32
    return %c0_i32, %c0_i32_0 : i32, i32
  }
  func.func @transform_8(%arg0: i32) -> (i32, i32) {
    %c0_i32 = arith.constant 0 : i32
    %c0_i32_0 = arith.constant 0 : i32
    %c0_i32_1 = arith.constant 0 : i32
    return %c0_i32, %c0_i32_0 : i32, i32
  }
  func.func @transform_9(%arg0: i32) -> (i32, i32) {
    %c0_i32 = arith.constant 0 : i32
    %c0_i32_0 = arith.constant 0 : i32
    %c0_i32_1 = arith.constant 0 : i32
    return %c0_i32, %c0_i32_0 : i32, i32
  }
  func.func @transform_10(%arg0: i32) -> (i32, i32, i32) {
    %c0_i32 = arith.constant 0 : i32
    %c0_i32_0 = arith.constant 0 : i32
    %c0_i32_1 = arith.constant 0 : i32
    %c0_i32_2 = arith.constant 0 : i32
    return %c0_i32, %c0_i32_0, %c0_i32_1 : i32, i32, i32
  }
  func.func @transform_11(%arg0: i32) -> (i32, i32) {
    %c0_i32 = arith.constant 0 : i32
    %c0_i32_0 = arith.constant 0 : i32
    %c0_i32_1 = arith.constant 0 : i32
    return %c0_i32, %c0_i32_0 : i32, i32
  }
  func.func @transform_12(%arg0: i32) -> (i32, i32, i32) {
    %c0_i32 = arith.constant 0 : i32
    %c0_i32_0 = arith.constant 0 : i32
    %c0_i32_1 = arith.constant 0 : i32
    return %c0_i32, %arg0, %c0_i32_0 : i32, i32, i32
  }
}

</mosaic_0001>

<llo_original>
// kernel: tpu_custom_call.1
$region0: #{tpu_custom_call.1}
  #allocation0 [shape = 'u32[]', space=smem, size = 0x4, offset = 0x4, fixed_abs, tag = 'smem constant byte address 0x4 - core index']
  #allocation1 [shape = 'u32[144,128]{1,0:T(1,128)}', space=vmem, size = 0x12000, scoped, tag = 'internal scratch']
  %s0 = inlined_call_operand.hbm [shape: f32[8,32], index: 0, kind: input, shape index: {}]
  %s1 = inlined_call_operand.hbm [shape: f32[8,32], index: 1, kind: input, shape index: {}]
  %s2 = inlined_call_operand.hbm [shape: f32[8,32], index: 2, kind: input, shape index: {}]
  %s3 = inlined_call_operand.hbm [shape: bf16[32,256], index: 3, kind: input, shape index: {}]
  %s4 = inlined_call_operand.hbm [shape: bf16[32,256], index: 4, kind: input, shape index: {}]
  %s5 = inlined_call_operand.hbm [shape: bf16[32,256], index: 5, kind: input, shape index: {}]
  %s6 = inlined_call_operand.hbm [shape: f32[1,256], index: 6, kind: input, shape index: {}]
  %s7 = inlined_call_operand.hbm [shape: bf16[128,256], index: 7, kind: input, shape index: {}]
  %s8 = inlined_call_operand.hbm [shape: f32[1,256], index: 8, kind: input, shape index: {}]
  %s9 = inlined_call_operand.hbm [shape: f32[3,128], index: 9, kind: input, shape index: {}]
  %s10 = inlined_call_operand.hbm [shape: bf16[3,128,256], index: 10, kind: input, shape index: {}]
  %s11 = inlined_call_operand.hbm [shape: bf16[256,128], index: 11, kind: input, shape index: {}]
  %s12 = inlined_call_operand.hbm [shape: f32[3,8,128], index: 12, kind: output, shape index: {}]
  %s13 = sld [smem:[#allocation0]]
  $region106: #{tpu_custom_call.1} parent=0
    _
  %s15 = ssub.s32 1, %s13
  %s16 = scalar_select 0, %s15, %s13
  $region1: #{tpu_custom_call.1} parent=0
    #allocation2 [shape = 'u8[4096]{0}', space=vmem, size = 0x1000, scoped, tag = 'input window, operand 0, single buffered']
    #allocation3 [shape = 's32[1]{0}', space=sflag, size = 0x4, scoped, tag = 'scoped memory for tpu_custom_call.1']
    #allocation4 [shape = 's32[1]{0}', space=sflag, size = 0x4, scoped, tag = 'scoped memory for tpu_custom_call.1']
    #allocation5 [shape = 'u8[4096]{0}', space=vmem, size = 0x1000, scoped, tag = 'input window, operand 1, single buffered']
    #allocation6 [shape = 's32[1]{0}', space=sflag, size = 0x4, scoped, tag = 'scoped memory for tpu_custom_call.1']
    #allocation7 [shape = 'u8[4096]{0}', space=vmem, size = 0x1000, scoped, tag = 'input window, operand 2, single buffered']
    #allocation8 [shape = 'u8[16384]{0}', space=vmem, size = 0x4000, scoped, tag = 'input window, operand 3, single buffered']
    #allocation9 [shape = 's32[1]{0}', space=sflag, size = 0x4, scoped, tag = 'scoped memory for tpu_custom_call.1']
    #allocation10 [shape = 'u8[16384]{0}', space=vmem, size = 0x4000, scoped, tag = 'input window, operand 4, single buffered']
    #allocation11 [shape = 'u8[16384]{0}', space=vmem, size = 0x4000, scoped, tag = 'input window, operand 5, single buffered']
    #allocation12 [shape = 's32[1]{0}', space=sflag, size = 0x4, scoped, tag = 'scoped memory for tpu_custom_call.1']
    #allocation13 [shape = 'u8[1024]{0}', space=vmem, size = 0x400, scoped, tag = 'input window, operand 6, single buffered']
    #allocation14 [shape = 'u8[65536]{0}', space=vmem, size = 0x10000, scoped, tag = 'input window, operand 7, single buffered']
    #allocation15 [shape = 's32[1]{0}', space=sflag, size = 0x4, scoped, tag = 'scoped memory for tpu_custom_call.1']
    #allocation16 [shape = 'u8[1024]{0}', space=vmem, size = 0x400, scoped, tag = 'input window, operand 8, single buffered']
    #allocation17 [shape = 'u8[2048]{0}', space=vmem, size = 0x800, scoped, tag = 'input window, operand 9, single buffered']
    #allocation18 [shape = 's32[1]{0}', space=sflag, size = 0x4, scoped, tag = 'scoped memory for tpu_custom_call.1']
    #allocation19 [shape = 'u8[196608]{0}', space=vmem, size = 0x30000, scoped, tag = 'input window, operand 10, single buffered']
    #allocation20 [shape = 'u8[65536]{0}', space=vmem, size = 0x10000, scoped, tag = 'input window, operand 11, single buffered']
    #allocation21 [shape = 's32[1]{0}', space=sflag, size = 0x4, scoped, tag = 'scoped memory for tpu_custom_call.1']
    #allocation22 [shape = 'u8[12288]{0}', space=vmem, size = 0x3000, scoped, tag = 'output window, operand 0, single buffered']
    %17 = vsyncpa [#allocation3], 0
    %18 = vsyncpa [#allocation6], 0
    %19 = vsyncpa [#allocation9], 0
    %20 = vsyncpa [#allocation12], 0
    %21 = vsyncpa [#allocation15], 0
    %22 = vsyncpa [#allocation18], 0
    %23 = vsyncpa [#allocation21], 0
    %24 = vsyncpa [#allocation4], 0
    // Predicated region
    $region2: #{tpu_custom_call.1} parent=1 // pred_check
      _
    $region3: #{tpu_custom_call.1} parent=1 // pred_check_branch
      %26 = sbr.rel (0) target = $region5
    $region4: #{tpu_custom_call.1} parent=1 // pred_region
      %s28 = ssub.s32 128, 128
      %29 = vsyncadd [#allocation3], %s28
      %s31 = sshll.u32 [#allocation2], 4
      %s32 = int_to_ptr.vmem [resolvable:$true] %s31
      %34 = dma.hbm_to_vmem [thread:$0]  %s0, 128, %s32, [#allocation3]
    $region5: #{tpu_custom_call.1} parent=1 // pred_fallthru
      _
    // Predicated region
    $region6: #{tpu_custom_call.1} parent=1 // pred_check
      _
    $region7: #{tpu_custom_call.1} parent=1 // pred_check_branch
      %36 = sbr.rel (0) target = $region9
    $region8: #{tpu_custom_call.1} parent=1 // pred_region
      %s38 = ssub.s32 128, 128
      %39 = vsyncadd [#allocation6], %s38
      %s41 = sshll.u32 [#allocation5], 4
      %s42 = int_to_ptr.vmem [resolvable:$true] %s41
      %44 = dma.hbm_to_vmem [thread:$0]  %s1, 128, %s42, [#allocation6]
    $region9: #{tpu_custom_call.1} parent=1 // pred_fallthru
      _
    // Predicated region
    $region10: #{tpu_custom_call.1} parent=1 // pred_check
      _
    $region11: #{tpu_custom_call.1} parent=1 // pred_check_branch
      %46 = sbr.rel (0) target = $region13
    $region12: #{tpu_custom_call.1} parent=1 // pred_region
      %s48 = ssub.s32 128, 128
      %49 = vsyncadd [#allocation6], %s48
      %s51 = sshll.u32 [#allocation7], 4
      %s52 = int_to_ptr.vmem [resolvable:$true] %s51
      %54 = dma.hbm_to_vmem [thread:$0]  %s2, 128, %s52, [#allocation6]
    $region13: #{tpu_custom_call.1} parent=1 // pred_fallthru
      _
    // Predicated region
    $region14: #{tpu_custom_call.1} parent=1 // pred_check
      _
    $region15: #{tpu_custom_call.1} parent=1 // pred_check_branch
      %56 = sbr.rel (0) target = $region17
    $region16: #{tpu_custom_call.1} parent=1 // pred_region
      %s58 = ssub.s32 512, 512
      %59 = vsyncadd [#allocation9], %s58
      %s60 = sshll.u32 [#allocation8], 4
      %s61 = int_to_ptr.vmem [resolvable:$true] %s60
      %66 = dma.hbm_to_vmem [thread:$0]  %s3, 512, %s61, [#allocation9], 128, 128, 8
    $region17: #{tpu_custom_call.1} parent=1 // pred_fallthru
      _
    // Predicated region
    $region18: #{tpu_custom_call.1} parent=1 // pred_check
      _
    $region19: #{tpu_custom_call.1} parent=1 // pred_check_branch
      %68 = sbr.rel (0) target = $region21
    $region20: #{tpu_custom_call.1} parent=1 // pred_region
      %s70 = ssub.s32 512, 512
      %71 = vsyncadd [#allocation9], %s70
      %s72 = sshll.u32 [#allocation10], 4
      %s73 = int_to_ptr.vmem [resolvable:$true] %s72
      %78 = dma.hbm_to_vmem [thread:$0]  %s4, 512, %s73, [#allocation9], 128, 128, 8
    $region21: #{tpu_custom_call.1} parent=1 // pred_fallthru
      _
    // Predicated region
    $region22: #{tpu_custom_call.1} parent=1 // pred_check
      _
    $region23: #{tpu_custom_call.1} parent=1 // pred_check_branch
      %80 = sbr.rel (0) target = $region25
    $region24: #{tpu_custom_call.1} parent=1 // pred_region
      %s82 = ssub.s32 512, 512
      %83 = vsyncadd [#allocation12], %s82
      %s84 = sshll.u32 [#allocation11], 4
      %s85 = int_to_ptr.vmem [resolvable:$true] %s84
      %90 = dma.hbm_to_vmem [thread:$0]  %s5, 512, %s85, [#allocation12], 128, 128, 8
    $region25: #{tpu_custom_call.1} parent=1 // pred_fallthru
      _
    // Predicated region
    $region26: #{tpu_custom_call.1} parent=1 // pred_check
      _
    $region27: #{tpu_custom_call.1} parent=1 // pred_check_branch
      %92 = sbr.rel (0) target = $region29
    $region28: #{tpu_custom_call.1} parent=1 // pred_region
      %s94 = ssub.s32 32, 32
      %95 = vsyncadd [#allocation12], %s94
      %s97 = sshll.u32 [#allocation13], 4
      %s98 = int_to_ptr.vmem [resolvable:$true] %s97
      %100 = dma.hbm_to_vmem [thread:$0]  %s6, 32, %s98, [#allocation12]
    $region29: #{tpu_custom_call.1} parent=1 // pred_fallthru
      _
    // Predicated region
    $region30: #{tpu_custom_call.1} parent=1 // pred_check
      _
    $region31: #{tpu_custom_call.1} parent=1 // pred_check_branch
      %102 = sbr.rel (0) target = $region33
    $region32: #{tpu_custom_call.1} parent=1 // pred_region
      %s104 = ssub.s32 2048, 2048
      %105 = vsyncadd [#allocation15], %s104
      %s106 = sshll.u32 [#allocation14], 4
      %s107 = int_to_ptr.vmem [resolvable:$true] %s106
      %112 = dma.hbm_to_vmem [thread:$0]  %s7, 2048, %s107, [#allocation15], 128, 128, 8
    $region33: #{tpu_custom_call.1} parent=1 // pred_fallthru
      _
    // Predicated region
    $region34: #{tpu_custom_call.1} parent=1 // pred_check
      _
    $region35: #{tpu_custom_call.1} parent=1 // pred_check_branch
      %114 = sbr.rel (0) target = $region37
    $region36: #{tpu_custom_call.1} parent=1 // pred_region
      %s116 = ssub.s32 32, 32
      %117 = vsyncadd [#allocation15], %s116
      %s119 = sshll.u32 [#allocation16], 4
      %s120 = int_to_ptr.vmem [resolvable:$true] %s119
      %122 = dma.hbm_to_vmem [thread:$0]  %s8, 32, %s120, [#allocation15]
    $region37: #{tpu_custom_call.1} parent=1 // pred_fallthru
      _
    // Predicated region
    $region38: #{tpu_custom_call.1} parent=1 // pred_check
      _
    $region39: #{tpu_custom_call.1} parent=1 // pred_check_branch
      %124 = sbr.rel (0) target = $region41
    $region40: #{tpu_custom_call.1} parent=1 // pred_region
      %s126 = ssub.s32 64, 64
      %127 = vsyncadd [#allocation18], %s126
      %s129 = sshll.u32 [#allocation17], 4
      %s130 = int_to_ptr.vmem [resolvable:$true] %s129
      %132 = dma.hbm_to_vmem [thread:$0]  %s9, 64, %s130, [#allocation18]
    $region41: #{tpu_custom_call.1} parent=1 // pred_fallthru
      _
    // Predicated region
    $region42: #{tpu_custom_call.1} parent=1 // pred_check
      _
    $region43: #{tpu_custom_call.1} parent=1 // pred_check_branch
      %134 = sbr.rel (0) target = $region45
    $region44: #{tpu_custom_call.1} parent=1 // pred_region
      %s136 = ssub.s32 6144, 6144
      %137 = vsyncadd [#allocation18], %s136
      %s138 = sshll.u32 [#allocation19], 4
      %s139 = int_to_ptr.vmem [resolvable:$true] %s138
      %144 = dma.hbm_to_vmem [thread:$0]  %s10, 6144, %s139, [#allocation18], 128, 128, 8
    $region45: #{tpu_custom_call.1} parent=1 // pred_fallthru
      _
    // Predicated region
    $region46: #{tpu_custom_call.1} parent=1 // pred_check
      _
    $region47: #{tpu_custom_call.1} parent=1 // pred_check_branch
      %146 = sbr.rel (0) target = $region49
    $region48: #{tpu_custom_call.1} parent=1 // pred_region
      %s148 = ssub.s32 2048, 2048
      %149 = vsyncadd [#allocation21], %s148
      %s150 = sshll.u32 [#allocation20], 4
      %s151 = int_to_ptr.vmem [resolvable:$true] %s150
      %156 = dma.hbm_to_vmem [thread:$0]  %s11, 2048, %s151, [#allocation21], 64, 64, 4
    $region49: #{tpu_custom_call.1} parent=1 // pred_fallthru
      _
    // Predicated region
    $region50: #{tpu_custom_call.1} parent=1 // pred_check
      _
    $region51: #{tpu_custom_call.1} parent=1 // pred_check_branch
      %158 = sbr.rel (0) target = $region53
    $region52: #{tpu_custom_call.1} parent=1 // pred_region
      %159 = dma.done [#allocation3], 128
    $region53: #{tpu_custom_call.1} parent=1 // pred_fallthru
      _
    // Predicated region
    $region54: #{tpu_custom_call.1} parent=1 // pred_check
      _
    $region55: #{tpu_custom_call.1} parent=1 // pred_check_branch
      %161 = sbr.rel (0) target = $region57
    $region56: #{tpu_custom_call.1} parent=1 // pred_region
      %162 = dma.done [#allocation6], 128
    $region57: #{tpu_custom_call.1} parent=1 // pred_fallthru
      _
    // Predicated region
    $region58: #{tpu_custom_call.1} parent=1 // pred_check
      _
    $region59: #{tpu_custom_call.1} parent=1 // pred_check_branch
      %164 = sbr.rel (0) target = $region61
    $region60: #{tpu_custom_call.1} parent=1 // pred_region
      %165 = dma.done [#allocation6], 128
    $region61: #{tpu_custom_call.1} parent=1 // pred_fallthru
      _
    // Predicated region
    $region62: #{tpu_custom_call.1} parent=1 // pred_check
      _
    $region63: #{tpu_custom_call.1} parent=1 // pred_check_branch
      %167 = sbr.rel (0) target = $region65
    $region64: #{tpu_custom_call.1} parent=1 // pred_region
      %168 = dma.done [#allocation9], 512
    $region65: #{tpu_custom_call.1} parent=1 // pred_fallthru
      _
    // Predicated region
    $region66: #{tpu_custom_call.1} parent=1 // pred_check
      _
    $region67: #{tpu_custom_call.1} parent=1 // pred_check_branch
      %170 = sbr.rel (0) target = $region69
    $region68: #{tpu_custom_call.1} parent=1 // pred_region
      %171 = dma.done [#allocation9], 512
    $region69: #{tpu_custom_call.1} parent=1 // pred_fallthru
      _
    // Predicated region
    $region70: #{tpu_custom_call.1} parent=1 // pred_check
      _
    $region71: #{tpu_custom_call.1} parent=1 // pred_check_branch
      %173 = sbr.rel (0) target = $region73
    $region72: #{tpu_custom_call.1} parent=1 // pred_region
      %174 = dma.done [#allocation12], 512
    $region73: #{tpu_custom_call.1} parent=1 // pred_fallthru
      _
    // Predicated region
    $region74: #{tpu_custom_call.1} parent=1 // pred_check
      _
    $region75: #{tpu_custom_call.1} parent=1 // pred_check_branch
      %176 = sbr.rel (0) target = $region77
    $region76: #{tpu_custom_call.1} parent=1 // pred_region
      %177 = dma.done [#allocation12], 32
    $region77: #{tpu_custom_call.1} parent=1 // pred_fallthru
      _
    // Predicated region
    $region78: #{tpu_custom_call.1} parent=1 // pred_check
      _
    $region79: #{tpu_custom_call.1} parent=1 // pred_check_branch
      %179 = sbr.rel (0) target = $region81
    $region80: #{tpu_custom_call.1} parent=1 // pred_region
      %180 = dma.done [#allocation15], 2048
    $region81: #{tpu_custom_call.1} parent=1 // pred_fallthru
      _
    // Predicated region
    $region82: #{tpu_custom_call.1} parent=1 // pred_check
      _
    $region83: #{tpu_custom_call.1} parent=1 // pred_check_branch
      %182 = sbr.rel (0) target = $region85
    $region84: #{tpu_custom_call.1} parent=1 // pred_region
      %183 = dma.done [#allocation15], 32
    $region85: #{tpu_custom_call.1} parent=1 // pred_fallthru
      _
    // Predicated region
    $region86: #{tpu_custom_call.1} parent=1 // pred_check
      _
    $region87: #{tpu_custom_call.1} parent=1 // pred_check_branch
      %185 = sbr.rel (0) target = $region89
    $region88: #{tpu_custom_call.1} parent=1 // pred_region
      %186 = dma.done [#allocation18], 64
    $region89: #{tpu_custom_call.1} parent=1 // pred_fallthru
      _
    // Predicated region
    $region90: #{tpu_custom_call.1} parent=1 // pred_check
      _
    $region91: #{tpu_custom_call.1} parent=1 // pred_check_branch
      %188 = sbr.rel (0) target = $region93
    $region92: #{tpu_custom_call.1} parent=1 // pred_region
      %189 = dma.done [#allocation18], 6144
    $region93: #{tpu_custom_call.1} parent=1 // pred_fallthru
      _
    // Predicated region
    $region94: #{tpu_custom_call.1} parent=1 // pred_check
      _
    $region95: #{tpu_custom_call.1} parent=1 // pred_check_branch
      %191 = sbr.rel (0) target = $region97
    $region96: #{tpu_custom_call.1} parent=1 // pred_region
      %192 = dma.done [#allocation21], 2048
    $region97: #{tpu_custom_call.1} parent=1 // pred_fallthru
      _
    %v194 = vld [vmem:[#allocation2] sm:$0xff]
    %v195 = vpack.c.bf16 %v194, %v194
    %v196 = vld [vmem:[#allocation5] sm:$0xff]
    %v197 = vpack.c.bf16 %v196, %v196
    %v198 = vld [vmem:[#allocation7] sm:$0xff]
    %v199 = vpack.c.bf16 %v198, %v198
    %v200 = vld [vmem:[#allocation8] sm:$0xff]
    %v201 = vld [vmem:[#allocation8 + $0x8] sm:$0xff]
    %v202 = vld [vmem:[#allocation8 + $0x10] sm:$0xff]
    %v203 = vld [vmem:[#allocation8 + $0x18] sm:$0xff]
    %v204 = vld [vmem:[#allocation10] sm:$0xff]
    %v205 = vld [vmem:[#allocation10 + $0x8] sm:$0xff]
    %v206 = vld [vmem:[#allocation10 + $0x10] sm:$0xff]
    %v207 = vld [vmem:[#allocation10 + $0x18] sm:$0xff]
    %v212 = vunpack.c.l.b16 %v204
    %v213 = vunpack.c.h.b16 %v204
    %v214 = vunpack.c.l.b16 %v205
    %v215 = vunpack.c.h.b16 %v205
    %v216 = vunpack.c.l.b16 %v206
    %v217 = vunpack.c.h.b16 %v206
    %v218 = vunpack.c.l.b16 %v207
    %v219 = vunpack.c.h.b16 %v207
    %v220 = vpack.c.b16 %v214, %v212
    %v221 = vpack.c.b16 %v215, %v213
    %v222 = vpack.c.b16 %v218, %v216
    %v223 = vpack.c.b16 %v219, %v217
    %vm228 = vcmask 261120
    %v230 = vsel %vm228, %v197, 0
    %232 = vmatprep.subr.bf16.mxu0 %v221
    %233 = vmatpush1.bf16.msra.mxu0 %v220
    %234 = vmatprep.subr.bf16.mxu0 %v223
    %235 = vmatpush1.bf16.msra.mxu0 %v222
    %236 = vmatprep.subr.bf16.mxu0 0
    %237 = vmatpush1.bf16.msra.mxu0 0
    %238 = vmatprep.subr.bf16.mxu0 0
    %239 = vmatpush1.bf16.msra.mxu0 0
    %240 = vmatprep.subr.bf16.mxu0 0
    %241 = vmatpush1.bf16.msra.mxu0 0
    %242 = vmatprep.subr.bf16.mxu0 0
    %243 = vmatpush1.bf16.msra.mxu0 0
    %244 = vmatprep.subr.bf16.mxu0 0
    %245 = vmatpush1.bf16.msra.mxu0 0
    %246 = vmatprep.subr.bf16.mxu0 0
    %247 = vmatpush1.bf16.msra.mxu0 0
    %248 = vmatprep.subr.bf16.mxu0 0
    %249 = vmatpush1.bf16.msra.mxu0 0
    %250 = vmatprep.subr.bf16.mxu0 0
    %251 = vmatpush1.bf16.msra.mxu0 0
    %252 = vmatprep.subr.bf16.mxu0 0
    %253 = vmatpush1.bf16.msra.mxu0 0
    %254 = vmatprep.subr.bf16.mxu0 0
    %255 = vmatpush1.bf16.msra.mxu0 0
    %256 = vmatprep.subr.bf16.mxu0 0
    %257 = vmatpush1.bf16.msra.mxu0 0
    %258 = vmatprep.subr.bf16.mxu0 0
    %259 = vmatpush1.bf16.msra.mxu0 0
    %260 = vmatprep.subr.bf16.mxu0 0
    %261 = vmatpush1.bf16.msra.mxu0 0
    %262 = vmatprep.subr.bf16.mxu0 0
    %263 = vmatpush1.bf16.msra.mxu0 0
    %264 = vmatprep.mubr.bf16.mxu0 0
    %265 = vmatmul.mubr.bf16.gmra.mrb[0].mxu0 %v230
    %v266 = vpop.f32.mrb[0].mxu0
    %v267 = vadd.f32 0.0, %v266
    %v268 = vpop.f32.mrb[0].mxu0
    %v269 = vadd.f32 0.0, %v268
    %v270 = vpop.f32.mrb[0].mxu0
    %v271 = vpop.f32.mrb[0].mxu0
    %272 = vdwg.mxu0
    %v277 = vunpack.c.l.b16 %v200
    %v278 = vunpack.c.h.b16 %v200
    %v279 = vunpack.c.l.b16 %v201
    %v280 = vunpack.c.h.b16 %v201
    %v281 = vunpack.c.l.b16 %v202
    %v282 = vunpack.c.h.b16 %v202
    %v283 = vunpack.c.l.b16 %v203
    %v284 = vunpack.c.h.b16 %v203
    %v285 = vpack.c.b16 %v279, %v277
    %v286 = vpack.c.b16 %v280, %v278
    %v287 = vpack.c.b16 %v283, %v281
    %v288 = vpack.c.b16 %v284, %v282
    %v294 = vsel %vm228, %v195, 0
    %296 = vmatprep.subr.bf16.mxu0 %v286
    %297 = vmatpush1.bf16.msra.mxu0 %v285
    %298 = vmatprep.subr.bf16.mxu0 %v288
    %299 = vmatpush1.bf16.msra.mxu0 %v287
    %300 = vmatprep.subr.bf16.mxu0 0
    %301 = vmatpush1.bf16.msra.mxu0 0
    %302 = vmatprep.subr.bf16.mxu0 0
    %303 = vmatpush1.bf16.msra.mxu0 0
    %304 = vmatprep.subr.bf16.mxu0 0
    %305 = vmatpush1.bf16.msra.mxu0 0
    %306 = vmatprep.subr.bf16.mxu0 0
    %307 = vmatpush1.bf16.msra.mxu0 0
    %308 = vmatprep.subr.bf16.mxu0 0
    %309 = vmatpush1.bf16.msra.mxu0 0
    %310 = vmatprep.subr.bf16.mxu0 0
    %311 = vmatpush1.bf16.msra.mxu0 0
    %312 = vmatprep.subr.bf16.mxu0 0
    %313 = vmatpush1.bf16.msra.mxu0 0
    %314 = vmatprep.subr.bf16.mxu0 0
    %315 = vmatpush1.bf16.msra.mxu0 0
    %316 = vmatprep.subr.bf16.mxu0 0
    %317 = vmatpush1.bf16.msra.mxu0 0
    %318 = vmatprep.subr.bf16.mxu0 0
    %319 = vmatpush1.bf16.msra.mxu0 0
    %320 = vmatprep.subr.bf16.mxu0 0
    %321 = vmatpush1.bf16.msra.mxu0 0
    %322 = vmatprep.subr.bf16.mxu0 0
    %323 = vmatpush1.bf16.msra.mxu0 0
    %324 = vmatprep.subr.bf16.mxu0 0
    %325 = vmatpush1.bf16.msra.mxu0 0
    %326 = vmatprep.subr.bf16.mxu0 0
    %327 = vmatpush1.bf16.msra.mxu0 0
    %328 = vmatprep.mubr.bf16.mxu0 0
    %329 = vmatmul.mubr.bf16.gmra.mrb[0].mxu0 %v294
    %v330 = vpop.f32.mrb[0].mxu0
    %v331 = vadd.f32 %v267, %v330
    %v332 = vpop.f32.mrb[0].mxu0
    %v333 = vadd.f32 %v269, %v332
    %v334 = vpop.f32.mrb[0].mxu0
    %v335 = vpop.f32.mrb[0].mxu0
    %336 = vdwg.mxu0
    %v337 = vld [vmem:[#allocation11] sm:$0xff]
    %v338 = vld [vmem:[#allocation11 + $0x8] sm:$0xff]
    %v339 = vld [vmem:[#allocation11 + $0x10] sm:$0xff]
    %v340 = vld [vmem:[#allocation11 + $0x18] sm:$0xff]
    %v345 = vunpack.c.l.b16 %v337
    %v346 = vunpack.c.h.b16 %v337
    %v347 = vunpack.c.l.b16 %v338
    %v348 = vunpack.c.h.b16 %v338
    %v349 = vunpack.c.l.b16 %v339
    %v350 = vunpack.c.h.b16 %v339
    %v351 = vunpack.c.l.b16 %v340
    %v352 = vunpack.c.h.b16 %v340
    %v353 = vpack.c.b16 %v347, %v345
    %v354 = vpack.c.b16 %v348, %v346
    %v355 = vpack.c.b16 %v351, %v349
    %v356 = vpack.c.b16 %v352, %v350
    %v362 = vsel %vm228, %v199, 0
    %364 = vmatprep.subr.bf16.mxu0 %v354
    %365 = vmatpush1.bf16.msra.mxu0 %v353
    %366 = vmatprep.subr.bf16.mxu0 %v356
    %367 = vmatpush1.bf16.msra.mxu0 %v355
    %368 = vmatprep.subr.bf16.mxu0 0
    %369 = vmatpush1.bf16.msra.mxu0 0
    %370 = vmatprep.subr.bf16.mxu0 0
    %371 = vmatpush1.bf16.msra.mxu0 0
    %372 = vmatprep.subr.bf16.mxu0 0
    %373 = vmatpush1.bf16.msra.mxu0 0
    %374 = vmatprep.subr.bf16.mxu0 0
    %375 = vmatpush1.bf16.msra.mxu0 0
    %376 = vmatprep.subr.bf16.mxu0 0
    %377 = vmatpush1.bf16.msra.mxu0 0
    %378 = vmatprep.subr.bf16.mxu0 0
    %379 = vmatpush1.bf16.msra.mxu0 0
    %380 = vmatprep.subr.bf16.mxu0 0
    %381 = vmatpush1.bf16.msra.mxu0 0
    %382 = vmatprep.subr.bf16.mxu0 0
    %383 = vmatpush1.bf16.msra.mxu0 0
    %384 = vmatprep.subr.bf16.mxu0 0
    %385 = vmatpush1.bf16.msra.mxu0 0
    %386 = vmatprep.subr.bf16.mxu0 0
    %387 = vmatpush1.bf16.msra.mxu0 0
    %388 = vmatprep.subr.bf16.mxu0 0
    %389 = vmatpush1.bf16.msra.mxu0 0
    %390 = vmatprep.subr.bf16.mxu0 0
    %391 = vmatpush1.bf16.msra.mxu0 0
    %392 = vmatprep.subr.bf16.mxu0 0
    %393 = vmatpush1.bf16.msra.mxu0 0
    %394 = vmatprep.subr.bf16.mxu0 0
    %395 = vmatpush1.bf16.msra.mxu0 0
    %396 = vmatprep.mubr.bf16.mxu0 0
    %397 = vmatmul.mubr.bf16.gmra.mrb[0].mxu0 %v362
    %v398 = vpop.f32.mrb[0].mxu0
    %v399 = vadd.f32 0.0, %v398
    %v400 = vpop.f32.mrb[0].mxu0
    %v401 = vadd.f32 0.0, %v400
    %v402 = vpop.f32.mrb[0].mxu0
    %v403 = vpop.f32.mrb[0].mxu0
    %404 = vdwg.mxu0
    %v405 = vadd.f32 %v331, %v399
    %v406 = vadd.f32 %v333, %v401
    %v407 = vld [vmem:[#allocation13] sm:$0x3]
    %v409 = vlaneseq
    %v410 = vshrl.u32 %v409, 7
    %v411 = vsub.s32 0, %v410
    %v412 = vrot.slane %v407, %v411
    %v413 = vlaneseq
    %v414 = vshrl.u32 %v413, 7
    %v415 = vsub.s32 1, %v414
    %v416 = vrot.slane %v407, %v415
    %v419 = vadd.f32 %v405, %v412
    %v420 = vadd.f32 %v406, %v416
    %v421 = vmax.f32 %v419, 0.0
    %v422 = vpack.c.bf16 %v421, %v421
    %v423 = vld [vmem:[#allocation14] sm:$0xff]
    %v424 = vld [vmem:[#allocation14 + $0x8] sm:$0xff]
    %v425 = vld [vmem:[#allocation14 + $0x10] sm:$0xff]
    %v426 = vld [vmem:[#allocation14 + $0x18] sm:$0xff]
    %v427 = vld [vmem:[#allocation14 + $0x20] sm:$0xff]
    %v428 = vld [vmem:[#allocation14 + $0x28] sm:$0xff]
    %v429 = vld [vmem:[#allocation14 + $0x30] sm:$0xff]
    %v430 = vld [vmem:[#allocation14 + $0x38] sm:$0xff]
    %v431 = vld [vmem:[#allocation14 + $0x40] sm:$0xff]
    %v432 = vld [vmem:[#allocation14 + $0x48] sm:$0xff]
    %v433 = vld [vmem:[#allocation14 + $0x50] sm:$0xff]
    %v434 = vld [vmem:[#allocation14 + $0x58] sm:$0xff]
    %v435 = vld [vmem:[#allocation14 + $0x60] sm:$0xff]
    %v436 = vld [vmem:[#allocation14 + $0x68] sm:$0xff]
    %v437 = vld [vmem:[#allocation14 + $0x70] sm:$0xff]
    %v438 = vld [vmem:[#allocation14 + $0x78] sm:$0xff]
    %v439 = vld [vmem:[#allocation16] sm:$0x3]
    %v441 = vlaneseq
    %v442 = vshrl.u32 %v441, 7
    %v443 = vsub.s32 0, %v442
    %v444 = vrot.slane %v439, %v443
    %v445 = vlaneseq
    %v446 = vshrl.u32 %v445, 7
    %v447 = vsub.s32 1, %v446
    %v448 = vrot.slane %v439, %v447
    %v467 = vunpack.c.l.b16 %v423
    %v468 = vunpack.c.h.b16 %v423
    %v469 = vunpack.c.l.b16 %v424
    %v470 = vunpack.c.h.b16 %v424
    %v471 = vunpack.c.l.b16 %v425
    %v472 = vunpack.c.h.b16 %v425
    %v473 = vunpack.c.l.b16 %v426
    %v474 = vunpack.c.h.b16 %v426
    %v475 = vunpack.c.l.b16 %v427
    %v476 = vunpack.c.h.b16 %v427
    %v477 = vunpack.c.l.b16 %v428
    %v478 = vunpack.c.h.b16 %v428
    %v479 = vunpack.c.l.b16 %v429
    %v480 = vunpack.c.h.b16 %v429
    %v481 = vunpack.c.l.b16 %v430
    %v482 = vunpack.c.h.b16 %v430
    %v483 = vunpack.c.l.b16 %v431
    %v484 = vunpack.c.h.b16 %v431
    %v485 = vunpack.c.l.b16 %v432
    %v486 = vunpack.c.h.b16 %v432
    %v487 = vunpack.c.l.b16 %v433
    %v488 = vunpack.c.h.b16 %v433
    %v489 = vunpack.c.l.b16 %v434
    %v490 = vunpack.c.h.b16 %v434
    %v491 = vunpack.c.l.b16 %v435
    %v492 = vunpack.c.h.b16 %v435
    %v493 = vunpack.c.l.b16 %v436
    %v494 = vunpack.c.h.b16 %v436
    %v495 = vunpack.c.l.b16 %v437
    %v496 = vunpack.c.h.b16 %v437
    %v497 = vunpack.c.l.b16 %v438
    %v498 = vunpack.c.h.b16 %v438
    %v499 = vpack.c.b16 %v469, %v467
    %v500 = vpack.c.b16 %v470, %v468
    %v501 = vpack.c.b16 %v473, %v471
    %v502 = vpack.c.b16 %v474, %v472
    %v503 = vpack.c.b16 %v477, %v475
    %v504 = vpack.c.b16 %v478, %v476
    %v505 = vpack.c.b16 %v481, %v479
    %v506 = vpack.c.b16 %v482, %v480
    %v507 = vpack.c.b16 %v485, %v483
    %v508 = vpack.c.b16 %v486, %v484
    %v509 = vpack.c.b16 %v489, %v487
    %v510 = vpack.c.b16 %v490, %v488
    %v511 = vpack.c.b16 %v493, %v491
    %v512 = vpack.c.b16 %v494, %v492
    %v513 = vpack.c.b16 %v497, %v495
    %v514 = vpack.c.b16 %v498, %v496
    %531 = vmatprep.subr.bf16.mxu0 %v500
    %532 = vmatpush1.bf16.msra.mxu0 %v499
    %533 = vmatprep.subr.bf16.mxu0 %v502
    %534 = vmatpush1.bf16.msra.mxu0 %v501
    %535 = vmatprep.subr.bf16.mxu0 %v504
    %536 = vmatpush1.bf16.msra.mxu0 %v503
    %537 = vmatprep.subr.bf16.mxu0 %v506
    %538 = vmatpush1.bf16.msra.mxu0 %v505
    %539 = vmatprep.subr.bf16.mxu0 %v508
    %540 = vmatpush1.bf16.msra.mxu0 %v507
    %541 = vmatprep.subr.bf16.mxu0 %v510
    %542 = vmatpush1.bf16.msra.mxu0 %v509
    %543 = vmatprep.subr.bf16.mxu0 %v512
    %544 = vmatpush1.bf16.msra.mxu0 %v511
    %545 = vmatprep.subr.bf16.mxu0 %v514
    %546 = vmatpush1.bf16.msra.mxu0 %v513
    %547 = vmatprep.subr.bf16.mxu0 0
    %548 = vmatpush1.bf16.msra.mxu0 0
    %549 = vmatprep.subr.bf16.mxu0 0
    %550 = vmatpush1.bf16.msra.mxu0 0
    %551 = vmatprep.subr.bf16.mxu0 0
    %552 = vmatpush1.bf16.msra.mxu0 0
    %553 = vmatprep.subr.bf16.mxu0 0
    %554 = vmatpush1.bf16.msra.mxu0 0
    %555 = vmatprep.subr.bf16.mxu0 0
    %556 = vmatpush1.bf16.msra.mxu0 0
    %557 = vmatprep.subr.bf16.mxu0 0
    %558 = vmatpush1.bf16.msra.mxu0 0
    %559 = vmatprep.subr.bf16.mxu0 0
    %560 = vmatpush1.bf16.msra.mxu0 0
    %561 = vmatprep.subr.bf16.mxu0 0
    %562 = vmatpush1.bf16.msra.mxu0 0
    %563 = vmatprep.mubr.bf16.mxu0 0
    %564 = vmatmul.mubr.bf16.gmra.mrb[0].mxu0 %v422
    %v565 = vpop.f32.mrb[0].mxu0
    %v566 = vadd.f32 %v444, %v565
    %v567 = vpop.f32.mrb[0].mxu0
    %v568 = vadd.f32 %v448, %v567
    %v569 = vpop.f32.mrb[0].mxu0
    %v570 = vpop.f32.mrb[0].mxu0
    %571 = vdwg.mxu0
    %v572 = vld [vmem:[#allocation17] sm:$0x7]
    %vm573 = vcmp.gt.f32.partialorder %v572, 0.5
    %v574 = vsel %vm573, 1, 0
    %v575 = vlaneseq
    %v576 = vshrl.u32 %v575, 7
    %v577 = vsub.s32 0, %v576
    %v578 = vrot.slane %v574, %v577
    %vm579 = vcmp.eq.s32.totalorder %v578, 1
    %v580 = vsel %vm579, %v420, -1e+30
    %581 = vmax.xlane.f32.xlu0 %v580
    %v582 = vpop.xlane.xlu0 %581
    %v583 = vlaneseq
    %v584 = vshrl.u32 %v583, 7
    %v585 = vsub.s32 0, %v584
    %v586 = vrot.slane %v572, %v585
    %v587 = vmul.f32 %v582, %v586
    %v588 = vadd.f32 %v587, 0.0
    %v589 = vlaneseq
    %v590 = vshrl.u32 %v589, 7
    %v591 = vsub.s32 1, %v590
    %v592 = vrot.slane %v574, %v591
    %vm593 = vcmp.eq.s32.totalorder %v592, 1
    %v594 = vsel %vm593, %v420, -1e+30
    %595 = vmax.xlane.f32.xlu0 %v594
    %v596 = vpop.xlane.xlu0 %595
    %v597 = vlaneseq
    %v598 = vshrl.u32 %v597, 7
    %v599 = vsub.s32 1, %v598
    %v600 = vrot.slane %v572, %v599
    %v601 = vmul.f32 %v596, %v600
    %v602 = vadd.f32 %v588, %v601
    %v603 = vlaneseq
    %v604 = vshrl.u32 %v603, 7
    %v605 = vsub.s32 2, %v604
    %v606 = vrot.slane %v574, %v605
    %vm607 = vcmp.eq.s32.totalorder %v606, 1
    %v608 = vsel %vm607, %v420, -1e+30
    %609 = vmax.xlane.f32.xlu0 %v608
    %v610 = vpop.xlane.xlu0 %609
    %v611 = vlaneseq
    %v612 = vshrl.u32 %v611, 7
    %v613 = vsub.s32 2, %v612
    %v614 = vrot.slane %v572, %v613
    %v615 = vmul.f32 %v610, %v614
    %v616 = vadd.f32 %v602, %v615
    %v617 = vsub.f32 %v420, %v616
    %v618 = vmul.f32 %v617, 1.442695
    %v619 = vpow.pop %v618
    %v620 = vmul.f32 %v619, %v586
    %621 = vadd.xlane.f32.xlu0 %v620
    %v622 = vpop.xlane.xlu0 %621
    %v623 = vrcp.pop %v622
    %v624 = vmul.f32 %v622, %v623
    %v625 = vsub.f32 2.0, %v624
    %v626 = vmul.f32 %v623, %v625
    %v627 = vmul.f32 %v626, %v586
    %v628 = vadd.f32 %v627, 0.0
    %v629 = vmul.f32 %v619, %v600
    %630 = vadd.xlane.f32.xlu0 %v629
    %v631 = vpop.xlane.xlu0 %630
    %v632 = vrcp.pop %v631
    %v633 = vmul.f32 %v631, %v632
    %v634 = vsub.f32 2.0, %v633
    %v635 = vmul.f32 %v632, %v634
    %v636 = vmul.f32 %v635, %v600
    %v637 = vadd.f32 %v628, %v636
    %v638 = vmul.f32 %v619, %v614
    %639 = vadd.xlane.f32.xlu0 %v638
    %v640 = vpop.xlane.xlu0 %639
    %v641 = vrcp.pop %v640
    %v642 = vmul.f32 %v640, %v641
    %v643 = vsub.f32 2.0, %v642
    %v644 = vmul.f32 %v641, %v643
    %v645 = vmul.f32 %v644, %v614
    %v646 = vadd.f32 %v637, %v645
    %v647 = vmul.f32 %v619, %v646
    %v648 = vpack.c.bf16 %v647, %v647
    %v649 = vld [vmem:[#allocation19] sm:$0xff]
    %v650 = vld [vmem:[#allocation19 + $0x8] sm:$0xff]
    %v651 = vld [vmem:[#allocation19 + $0x10] sm:$0xff]
    %v652 = vld [vmem:[#allocation19 + $0x18] sm:$0xff]
    %v653 = vld [vmem:[#allocation19 + $0x20] sm:$0xff]
    %v654 = vld [vmem:[#allocation19 + $0x28] sm:$0xff]
    %v655 = vld [vmem:[#allocation19 + $0x30] sm:$0xff]
    %v656 = vld [vmem:[#allocation19 + $0x38] sm:$0xff]
    %v657 = vld [vmem:[#allocation19 + $0x40] sm:$0xff]
    %v658 = vld [vmem:[#allocation19 + $0x48] sm:$0xff]
    %v659 = vld [vmem:[#allocation19 + $0x50] sm:$0xff]
    %v660 = vld [vmem:[#allocation19 + $0x58] sm:$0xff]
    %v661 = vld [vmem:[#allocation19 + $0x60] sm:$0xff]
    %v662 = vld [vmem:[#allocation19 + $0x68] sm:$0xff]
    %v663 = vld [vmem:[#allocation19 + $0x70] sm:$0xff]
    %v664 = vld [vmem:[#allocation19 + $0x78] sm:$0xff]
    %v681 = vunpack.c.l.b16 %v649
    %v682 = vunpack.c.h.b16 %v649
    %v683 = vunpack.c.l.b16 %v650
    %v684 = vunpack.c.h.b16 %v650
    %v685 = vunpack.c.l.b16 %v651
    %v686 = vunpack.c.h.b16 %v651
    %v687 = vunpack.c.l.b16 %v652
    %v688 = vunpack.c.h.b16 %v652
    %v689 = vunpack.c.l.b16 %v653
    %v690 = vunpack.c.h.b16 %v653
    %v691 = vunpack.c.l.b16 %v654
    %v692 = vunpack.c.h.b16 %v654
    %v693 = vunpack.c.l.b16 %v655
    %v694 = vunpack.c.h.b16 %v655
    %v695 = vunpack.c.l.b16 %v656
    %v696 = vunpack.c.h.b16 %v656
    %v697 = vunpack.c.l.b16 %v657
    %v698 = vunpack.c.h.b16 %v657
    %v699 = vunpack.c.l.b16 %v658
    %v700 = vunpack.c.h.b16 %v658
    %v701 = vunpack.c.l.b16 %v659
    %v702 = vunpack.c.h.b16 %v659
    %v703 = vunpack.c.l.b16 %v660
    %v704 = vunpack.c.h.b16 %v660
    %v705 = vunpack.c.l.b16 %v661
    %v706 = vunpack.c.h.b16 %v661
    %v707 = vunpack.c.l.b16 %v662
    %v708 = vunpack.c.h.b16 %v662
    %v709 = vunpack.c.l.b16 %v663
    %v710 = vunpack.c.h.b16 %v663
    %v711 = vunpack.c.l.b16 %v664
    %v712 = vunpack.c.h.b16 %v664
    %v713 = vpack.c.b16 %v683, %v681
    %v714 = vpack.c.b16 %v684, %v682
    %v715 = vpack.c.b16 %v687, %v685
    %v716 = vpack.c.b16 %v688, %v686
    %v717 = vpack.c.b16 %v691, %v689
    %v718 = vpack.c.b16 %v692, %v690
    %v719 = vpack.c.b16 %v695, %v693
    %v720 = vpack.c.b16 %v696, %v694
    %v721 = vpack.c.b16 %v699, %v697
    %v722 = vpack.c.b16 %v700, %v698
    %v723 = vpack.c.b16 %v703, %v701
    %v724 = vpack.c.b16 %v704, %v702
    %v725 = vpack.c.b16 %v707, %v705
    %v726 = vpack.c.b16 %v708, %v706
    %v727 = vpack.c.b16 %v711, %v709
    %v728 = vpack.c.b16 %v712, %v710
    %745 = vmatprep.subr.bf16.mxu0 %v714
    %746 = vmatpush1.bf16.msra.mxu0 %v713
    %747 = vmatprep.subr.bf16.mxu0 %v716
    %748 = vmatpush1.bf16.msra.mxu0 %v715
    %749 = vmatprep.subr.bf16.mxu0 %v718
    %750 = vmatpush1.bf16.msra.mxu0 %v717
    %751 = vmatprep.subr.bf16.mxu0 %v720
    %752 = vmatpush1.bf16.msra.mxu0 %v719
    %753 = vmatprep.subr.bf16.mxu0 %v722
    %754 = vmatpush1.bf16.msra.mxu0 %v721
    %755 = vmatprep.subr.bf16.mxu0 %v724
    %756 = vmatpush1.bf16.msra.mxu0 %v723
    %757 = vmatprep.subr.bf16.mxu0 %v726
    %758 = vmatpush1.bf16.msra.mxu0 %v725
    %759 = vmatprep.subr.bf16.mxu0 %v728
    %760 = vmatpush1.bf16.msra.mxu0 %v727
    %761 = vmatprep.subr.bf16.mxu0 0
    %762 = vmatpush1.bf16.msra.mxu0 0
    %763 = vmatprep.subr.bf16.mxu0 0
    %764 = vmatpush1.bf16.msra.mxu0 0
    %765 = vmatprep.subr.bf16.mxu0 0
    %766 = vmatpush1.bf16.msra.mxu0 0
    %767 = vmatprep.subr.bf16.mxu0 0
    %768 = vmatpush1.bf16.msra.mxu0 0
    %769 = vmatprep.subr.bf16.mxu0 0
    %770 = vmatpush1.bf16.msra.mxu0 0
    %771 = vmatprep.subr.bf16.mxu0 0
    %772 = vmatpush1.bf16.msra.mxu0 0
    %773 = vmatprep.subr.bf16.mxu0 0
    %774 = vmatpush1.bf16.msra.mxu0 0
    %775 = vmatprep.subr.bf16.mxu0 0
    %776 = vmatpush1.bf16.msra.mxu0 0
    %777 = vmatprep.mubr.bf16.mxu0 0
    %778 = vmatmul.mubr.bf16.gmra.mrb[0].mxu0 %v648
    %v779 = vpop.f32.mrb[0].mxu0
    %v780 = vadd.f32 0.0, %v779
    %v781 = vpop.f32.mrb[0].mxu0
    %v782 = vadd.f32 0.0, %v781
    %v783 = vpop.f32.mrb[0].mxu0
    %v784 = vpop.f32.mrb[0].mxu0
    %785 = vdwg.mxu0
    %v786 = vmul.f32 %v780, %v566
    %v787 = vmul.f32 %v782, %v568
    %v788 = vpack.c.bf16 %v786, %v786
    %v789 = vpack.c.bf16 %v787, %v787
    %v790 = vld [vmem:[#allocation20] sm:$0xf]
    %v791 = vld [vmem:[#allocation20 + $0x4] sm:$0xf]
    %v792 = vld [vmem:[#allocation20 + $0x8] sm:$0xf]
    %v793 = vld [vmem:[#allocation20 + $0xc] sm:$0xf]
    %v794 = vld [vmem:[#allocation20 + $0x10] sm:$0xf]
    %v795 = vld [vmem:[#allocation20 + $0x14] sm:$0xf]
    %v796 = vld [vmem:[#allocation20 + $0x18] sm:$0xf]
    %v797 = vld [vmem:[#allocation20 + $0x1c] sm:$0xf]
    %v798 = vld [vmem:[#allocation20 + $0x20] sm:$0xf]
    %v799 = vld [vmem:[#allocation20 + $0x24] sm:$0xf]
    %v800 = vld [vmem:[#allocation20 + $0x28] sm:$0xf]
    %v801 = vld [vmem:[#allocation20 + $0x2c] sm:$0xf]
    %v802 = vld [vmem:[#allocation20 + $0x30] sm:$0xf]
    %v803 = vld [vmem:[#allocation20 + $0x34] sm:$0xf]
    %v804 = vld [vmem:[#allocation20 + $0x38] sm:$0xf]
    %v805 = vld [vmem:[#allocation20 + $0x3c] sm:$0xf]
    %v806 = vld [vmem:[#allocation20 + $0x40] sm:$0xf]
    %v807 = vld [vmem:[#allocation20 + $0x44] sm:$0xf]
    %v808 = vld [vmem:[#allocation20 + $0x48] sm:$0xf]
    %v809 = vld [vmem:[#allocation20 + $0x4c] sm:$0xf]
    %v810 = vld [vmem:[#allocation20 + $0x50] sm:$0xf]
    %v811 = vld [vmem:[#allocation20 + $0x54] sm:$0xf]
    %v812 = vld [vmem:[#allocation20 + $0x58] sm:$0xf]
    %v813 = vld [vmem:[#allocation20 + $0x5c] sm:$0xf]
    %v814 = vld [vmem:[#allocation20 + $0x60] sm:$0xf]
    %v815 = vld [vmem:[#allocation20 + $0x64] sm:$0xf]
    %v816 = vld [vmem:[#allocation20 + $0x68] sm:$0xf]
    %v817 = vld [vmem:[#allocation20 + $0x6c] sm:$0xf]
    %v818 = vld [vmem:[#allocation20 + $0x70] sm:$0xf]
    %v819 = vld [vmem:[#allocation20 + $0x74] sm:$0xf]
    %v820 = vld [vmem:[#allocation20 + $0x78] sm:$0xf]
    %v821 = vld [vmem:[#allocation20 + $0x7c] sm:$0xf]
    %v854 = vunpack.c.l.b16 %v790
    %v855 = vunpack.c.l.b16 %v791
    %v856 = vunpack.c.l.b16 %v792
    %v857 = vunpack.c.l.b16 %v793
    %v858 = vunpack.c.l.b16 %v794
    %v859 = vunpack.c.l.b16 %v795
    %v860 = vunpack.c.l.b16 %v796
    %v861 = vunpack.c.l.b16 %v797
    %v862 = vunpack.c.l.b16 %v798
    %v863 = vunpack.c.l.b16 %v799
    %v864 = vunpack.c.l.b16 %v800
    %v865 = vunpack.c.l.b16 %v801
    %v866 = vunpack.c.l.b16 %v802
    %v867 = vunpack.c.l.b16 %v803
    %v868 = vunpack.c.l.b16 %v804
    %v869 = vunpack.c.l.b16 %v805
    %v870 = vunpack.c.l.b16 %v806
    %v871 = vunpack.c.l.b16 %v807
    %v872 = vunpack.c.l.b16 %v808
    %v873 = vunpack.c.l.b16 %v809
    %v874 = vunpack.c.l.b16 %v810
    %v875 = vunpack.c.l.b16 %v811
    %v876 = vunpack.c.l.b16 %v812
    %v877 = vunpack.c.l.b16 %v813
    %v878 = vunpack.c.l.b16 %v814
    %v879 = vunpack.c.l.b16 %v815
    %v880 = vunpack.c.l.b16 %v816
    %v881 = vunpack.c.l.b16 %v817
    %v882 = vunpack.c.l.b16 %v818
    %v883 = vunpack.c.l.b16 %v819
    %v884 = vunpack.c.l.b16 %v820
    %v885 = vunpack.c.l.b16 %v821
    %v886 = vpack.c.b16 %v855, %v854
    %v887 = vpack.c.b16 %v857, %v856
    %v888 = vpack.c.b16 %v859, %v858
    %v889 = vpack.c.b16 %v861, %v860
    %v890 = vpack.c.b16 %v863, %v862
    %v891 = vpack.c.b16 %v865, %v864
    %v892 = vpack.c.b16 %v867, %v866
    %v893 = vpack.c.b16 %v869, %v868
    %v894 = vpack.c.b16 %v871, %v870
    %v895 = vpack.c.b16 %v873, %v872
    %v896 = vpack.c.b16 %v875, %v874
    %v897 = vpack.c.b16 %v877, %v876
    %v898 = vpack.c.b16 %v879, %v878
    %v899 = vpack.c.b16 %v881, %v880
    %v900 = vpack.c.b16 %v883, %v882
    %v901 = vpack.c.b16 %v885, %v884
    %918 = vmatprep.subr.bf16.mxu0 0
    %919 = vmatpush1.bf16.msra.mxu0 %v886
    %920 = vmatprep.subr.bf16.mxu0 0
    %921 = vmatpush1.bf16.msra.mxu0 %v887
    %922 = vmatprep.subr.bf16.mxu0 0
    %923 = vmatpush1.bf16.msra.mxu0 %v888
    %924 = vmatprep.subr.bf16.mxu0 0
    %925 = vmatpush1.bf16.msra.mxu0 %v889
    %926 = vmatprep.subr.bf16.mxu0 0
    %927 = vmatpush1.bf16.msra.mxu0 %v890
    %928 = vmatprep.subr.bf16.mxu0 0
    %929 = vmatpush1.bf16.msra.mxu0 %v891
    %930 = vmatprep.subr.bf16.mxu0 0
    %931 = vmatpush1.bf16.msra.mxu0 %v892
    %932 = vmatprep.subr.bf16.mxu0 0
    %933 = vmatpush1.bf16.msra.mxu0 %v893
    %934 = vmatprep.subr.bf16.mxu0 0
    %935 = vmatpush1.bf16.msra.mxu0 %v894
    %936 = vmatprep.subr.bf16.mxu0 0
    %937 = vmatpush1.bf16.msra.mxu0 %v895
    %938 = vmatprep.subr.bf16.mxu0 0
    %939 = vmatpush1.bf16.msra.mxu0 %v896
    %940 = vmatprep.subr.bf16.mxu0 0
    %941 = vmatpush1.bf16.msra.mxu0 %v897
    %942 = vmatprep.subr.bf16.mxu0 0
    %943 = vmatpush1.bf16.msra.mxu0 %v898
    %944 = vmatprep.subr.bf16.mxu0 0
    %945 = vmatpush1.bf16.msra.mxu0 %v899
    %946 = vmatprep.subr.bf16.mxu0 0
    %947 = vmatpush1.bf16.msra.mxu0 %v900
    %948 = vmatprep.subr.bf16.mxu0 0
    %949 = vmatpush1.bf16.msra.mxu0 %v901
    %950 = vmatprep.mubr.bf16.mxu0 %v789
    %951 = vmatmul.mubr.bf16.gmra.mrb[0].mxu0 %v788
    %v952 = vpop.f32.mrb[0].mxu0
    %v953 = vadd.f32 0.0, %v952
    %v954 = vpop.f32.mrb[0].mxu0
    %v955 = vpop.f32.mrb[0].mxu0
    %v956 = vpop.f32.mrb[0].mxu0
    %957 = vdwg.mxu0
    %958 = vst [vmem:[#allocation22] sm:$0xff] %v953
    %s959 = scalar_lea.vmem [#allocation19], 128
    %v960 = vld [vmem:[%s959] sm:$0xff]
    %v961 = vld [vmem:[%s959 + $0x8] sm:$0xff]
    %v962 = vld [vmem:[%s959 + $0x10] sm:$0xff]
    %v963 = vld [vmem:[%s959 + $0x18] sm:$0xff]
    %v964 = vld [vmem:[%s959 + $0x20] sm:$0xff]
    %v965 = vld [vmem:[%s959 + $0x28] sm:$0xff]
    %v966 = vld [vmem:[%s959 + $0x30] sm:$0xff]
    %v967 = vld [vmem:[%s959 + $0x38] sm:$0xff]
    %v968 = vld [vmem:[%s959 + $0x40] sm:$0xff]
    %v969 = vld [vmem:[%s959 + $0x48] sm:$0xff]
    %v970 = vld [vmem:[%s959 + $0x50] sm:$0xff]
    %v971 = vld [vmem:[%s959 + $0x58] sm:$0xff]
    %v972 = vld [vmem:[%s959 + $0x60] sm:$0xff]
    %v973 = vld [vmem:[%s959 + $0x68] sm:$0xff]
    %v974 = vld [vmem:[%s959 + $0x70] sm:$0xff]
    %v975 = vld [vmem:[%s959 + $0x78] sm:$0xff]
    %v992 = vunpack.c.l.b16 %v960
    %v993 = vunpack.c.h.b16 %v960
    %v994 = vunpack.c.l.b16 %v961
    %v995 = vunpack.c.h.b16 %v961
    %v996 = vunpack.c.l.b16 %v962
    %v997 = vunpack.c.h.b16 %v962
    %v998 = vunpack.c.l.b16 %v963
    %v999 = vunpack.c.h.b16 %v963
    %v1000 = vunpack.c.l.b16 %v964
    %v1001 = vunpack.c.h.b16 %v964
    %v1002 = vunpack.c.l.b16 %v965
    %v1003 = vunpack.c.h.b16 %v965
    %v1004 = vunpack.c.l.b16 %v966
    %v1005 = vunpack.c.h.b16 %v966
    %v1006 = vunpack.c.l.b16 %v967
    %v1007 = vunpack.c.h.b16 %v967
    %v1008 = vunpack.c.l.b16 %v968
    %v1009 = vunpack.c.h.b16 %v968
    %v1010 = vunpack.c.l.b16 %v969
    %v1011 = vunpack.c.h.b16 %v969
    %v1012 = vunpack.c.l.b16 %v970
    %v1013 = vunpack.c.h.b16 %v970
    %v1014 = vunpack.c.l.b16 %v971
    %v1015 = vunpack.c.h.b16 %v971
    %v1016 = vunpack.c.l.b16 %v972
    %v1017 = vunpack.c.h.b16 %v972
    %v1018 = vunpack.c.l.b16 %v973
    %v1019 = vunpack.c.h.b16 %v973
    %v1020 = vunpack.c.l.b16 %v974
    %v1021 = vunpack.c.h.b16 %v974
    %v1022 = vunpack.c.l.b16 %v975
    %v1023 = vunpack.c.h.b16 %v975
    %v1024 = vpack.c.b16 %v994, %v992
    %v1025 = vpack.c.b16 %v995, %v993
    %v1026 = vpack.c.b16 %v998, %v996
    %v1027 = vpack.c.b16 %v999, %v997
    %v1028 = vpack.c.b16 %v1002, %v1000
    %v1029 = vpack.c.b16 %v1003, %v1001
    %v1030 = vpack.c.b16 %v1006, %v1004
    %v1031 = vpack.c.b16 %v1007, %v1005
    %v1032 = vpack.c.b16 %v1010, %v1008
    %v1033 = vpack.c.b16 %v1011, %v1009
    %v1034 = vpack.c.b16 %v1014, %v1012
    %v1035 = vpack.c.b16 %v1015, %v1013
    %v1036 = vpack.c.b16 %v1018, %v1016
    %v1037 = vpack.c.b16 %v1019, %v1017
    %v1038 = vpack.c.b16 %v1022, %v1020
    %v1039 = vpack.c.b16 %v1023, %v1021
    %1056 = vmatprep.subr.bf16.mxu0 %v1025
    %1057 = vmatpush1.bf16.msra.mxu0 %v1024
    %1058 = vmatprep.subr.bf16.mxu0 %v1027
    %1059 = vmatpush1.bf16.msra.mxu0 %v1026
    %1060 = vmatprep.subr.bf16.mxu0 %v1029
    %1061 = vmatpush1.bf16.msra.mxu0 %v1028
    %1062 = vmatprep.subr.bf16.mxu0 %v1031
    %1063 = vmatpush1.bf16.msra.mxu0 %v1030
    %1064 = vmatprep.subr.bf16.mxu0 %v1033
    %1065 = vmatpush1.bf16.msra.mxu0 %v1032
    %1066 = vmatprep.subr.bf16.mxu0 %v1035
    %1067 = vmatpush1.bf16.msra.mxu0 %v1034
    %1068 = vmatprep.subr.bf16.mxu0 %v1037
    %1069 = vmatpush1.bf16.msra.mxu0 %v1036
    %1070 = vmatprep.subr.bf16.mxu0 %v1039
    %1071 = vmatpush1.bf16.msra.mxu0 %v1038
    %1072 = vmatprep.subr.bf16.mxu0 0
    %1073 = vmatpush1.bf16.msra.mxu0 0
    %1074 = vmatprep.subr.bf16.mxu0 0
    %1075 = vmatpush1.bf16.msra.mxu0 0
    %1076 = vmatprep.subr.bf16.mxu0 0
    %1077 = vmatpush1.bf16.msra.mxu0 0
    %1078 = vmatprep.subr.bf16.mxu0 0
    %1079 = vmatpush1.bf16.msra.mxu0 0
    %1080 = vmatprep.subr.bf16.mxu0 0
    %1081 = vmatpush1.bf16.msra.mxu0 0
    %1082 = vmatprep.subr.bf16.mxu0 0
    %1083 = vmatpush1.bf16.msra.mxu0 0
    %1084 = vmatprep.subr.bf16.mxu0 0
    %1085 = vmatpush1.bf16.msra.mxu0 0
    %1086 = vmatprep.subr.bf16.mxu0 0
    %1087 = vmatpush1.bf16.msra.mxu0 0
    %1088 = vmatprep.mubr.bf16.mxu0 0
    %1089 = vmatmul.mubr.bf16.gmra.mrb[0].mxu0 %v648
    %v1090 = vpop.f32.mrb[0].mxu0
    %v1091 = vadd.f32 0.0, %v1090
    %v1092 = vpop.f32.mrb[0].mxu0
    %v1093 = vadd.f32 0.0, %v1092
    %v1094 = vpop.f32.mrb[0].mxu0
    %v1095 = vpop.f32.mrb[0].mxu0
    %1096 = vdwg.mxu0
    %v1097 = vmul.f32 %v1091, %v566
    %v1098 = vmul.f32 %v1093, %v568
    %v1099 = vpack.c.bf16 %v1097, %v1097
    %v1100 = vpack.c.bf16 %v1098, %v1098
    %v1101 = vld [vmem:[#allocation20] sm:$0xf]
    %v1102 = vld [vmem:[#allocation20 + $0x4] sm:$0xf]
    %v1103 = vld [vmem:[#allocation20 + $0x8] sm:$0xf]
    %v1104 = vld [vmem:[#allocation20 + $0xc] sm:$0xf]
    %v1105 = vld [vmem:[#allocation20 + $0x10] sm:$0xf]
    %v1106 = vld [vmem:[#allocation20 + $0x14] sm:$0xf]
    %v1107 = vld [vmem:[#allocation20 + $0x18] sm:$0xf]
    %v1108 = vld [vmem:[#allocation20 + $0x1c] sm:$0xf]
    %v1109 = vld [vmem:[#allocation20 + $0x20] sm:$0xf]
    %v1110 = vld [vmem:[#allocation20 + $0x24] sm:$0xf]
    %v1111 = vld [vmem:[#allocation20 + $0x28] sm:$0xf]
    %v1112 = vld [vmem:[#allocation20 + $0x2c] sm:$0xf]
    %v1113 = vld [vmem:[#allocation20 + $0x30] sm:$0xf]
    %v1114 = vld [vmem:[#allocation20 + $0x34] sm:$0xf]
    %v1115 = vld [vmem:[#allocation20 + $0x38] sm:$0xf]
    %v1116 = vld [vmem:[#allocation20 + $0x3c] sm:$0xf]
    %v1117 = vld [vmem:[#allocation20 + $0x40] sm:$0xf]
    %v1118 = vld [vmem:[#allocation20 + $0x44] sm:$0xf]
    %v1119 = vld [vmem:[#allocation20 + $0x48] sm:$0xf]
    %v1120 = vld [vmem:[#allocation20 + $0x4c] sm:$0xf]
    %v1121 = vld [vmem:[#allocation20 + $0x50] sm:$0xf]
    %v1122 = vld [vmem:[#allocation20 + $0x54] sm:$0xf]
    %v1123 = vld [vmem:[#allocation20 + $0x58] sm:$0xf]
    %v1124 = vld [vmem:[#allocation20 + $0x5c] sm:$0xf]
    %v1125 = vld [vmem:[#allocation20 + $0x60] sm:$0xf]
    %v1126 = vld [vmem:[#allocation20 + $0x64] sm:$0xf]
    %v1127 = vld [vmem:[#allocation20 + $0x68] sm:$0xf]
    %v1128 = vld [vmem:[#allocation20 + $0x6c] sm:$0xf]
    %v1129 = vld [vmem:[#allocation20 + $0x70] sm:$0xf]
    %v1130 = vld [vmem:[#allocation20 + $0x74] sm:$0xf]
    %v1131 = vld [vmem:[#allocation20 + $0x78] sm:$0xf]
    %v1132 = vld [vmem:[#allocation20 + $0x7c] sm:$0xf]
    %v1165 = vunpack.c.l.b16 %v1101
    %v1166 = vunpack.c.l.b16 %v1102
    %v1167 = vunpack.c.l.b16 %v1103
    %v1168 = vunpack.c.l.b16 %v1104
    %v1169 = vunpack.c.l.b16 %v1105
    %v1170 = vunpack.c.l.b16 %v1106
    %v1171 = vunpack.c.l.b16 %v1107
    %v1172 = vunpack.c.l.b16 %v1108
    %v1173 = vunpack.c.l.b16 %v1109
    %v1174 = vunpack.c.l.b16 %v1110
    %v1175 = vunpack.c.l.b16 %v1111
    %v1176 = vunpack.c.l.b16 %v1112
    %v1177 = vunpack.c.l.b16 %v1113
    %v1178 = vunpack.c.l.b16 %v1114
    %v1179 = vunpack.c.l.b16 %v1115
    %v1180 = vunpack.c.l.b16 %v1116
    %v1181 = vunpack.c.l.b16 %v1117
    %v1182 = vunpack.c.l.b16 %v1118
    %v1183 = vunpack.c.l.b16 %v1119
    %v1184 = vunpack.c.l.b16 %v1120
    %v1185 = vunpack.c.l.b16 %v1121
    %v1186 = vunpack.c.l.b16 %v1122
    %v1187 = vunpack.c.l.b16 %v1123
    %v1188 = vunpack.c.l.b16 %v1124
    %v1189 = vunpack.c.l.b16 %v1125
    %v1190 = vunpack.c.l.b16 %v1126
    %v1191 = vunpack.c.l.b16 %v1127
    %v1192 = vunpack.c.l.b16 %v1128
    %v1193 = vunpack.c.l.b16 %v1129
    %v1194 = vunpack.c.l.b16 %v1130
    %v1195 = vunpack.c.l.b16 %v1131
    %v1196 = vunpack.c.l.b16 %v1132
    %v1197 = vpack.c.b16 %v1166, %v1165
    %v1198 = vpack.c.b16 %v1168, %v1167
    %v1199 = vpack.c.b16 %v1170, %v1169
    %v1200 = vpack.c.b16 %v1172, %v1171
    %v1201 = vpack.c.b16 %v1174, %v1173
    %v1202 = vpack.c.b16 %v1176, %v1175
    %v1203 = vpack.c.b16 %v1178, %v1177
    %v1204 = vpack.c.b16 %v1180, %v1179
    %v1205 = vpack.c.b16 %v1182, %v1181
    %v1206 = vpack.c.b16 %v1184, %v1183
    %v1207 = vpack.c.b16 %v1186, %v1185
    %v1208 = vpack.c.b16 %v1188, %v1187
    %v1209 = vpack.c.b16 %v1190, %v1189
    %v1210 = vpack.c.b16 %v1192, %v1191
    %v1211 = vpack.c.b16 %v1194, %v1193
    %v1212 = vpack.c.b16 %v1196, %v1195
    %1229 = vmatprep.subr.bf16.mxu0 0
    %1230 = vmatpush1.bf16.msra.mxu0 %v1197
    %1231 = vmatprep.subr.bf16.mxu0 0
    %1232 = vmatpush1.bf16.msra.mxu0 %v1198
    %1233 = vmatprep.subr.bf16.mxu0 0
    %1234 = vmatpush1.bf16.msra.mxu0 %v1199
    %1235 = vmatprep.subr.bf16.mxu0 0
    %1236 = vmatpush1.bf16.msra.mxu0 %v1200
    %1237 = vmatprep.subr.bf16.mxu0 0
    %1238 = vmatpush1.bf16.msra.mxu0 %v1201
    %1239 = vmatprep.subr.bf16.mxu0 0
    %1240 = vmatpush1.bf16.msra.mxu0 %v1202
    %1241 = vmatprep.subr.bf16.mxu0 0
    %1242 = vmatpush1.bf16.msra.mxu0 %v1203
    %1243 = vmatprep.subr.bf16.mxu0 0
    %1244 = vmatpush1.bf16.msra.mxu0 %v1204
    %1245 = vmatprep.subr.bf16.mxu0 0
    %1246 = vmatpush1.bf16.msra.mxu0 %v1205
    %1247 = vmatprep.subr.bf16.mxu0 0
    %1248 = vmatpush1.bf16.msra.mxu0 %v1206
    %1249 = vmatprep.subr.bf16.mxu0 0
    %1250 = vmatpush1.bf16.msra.mxu0 %v1207
    %1251 = vmatprep.subr.bf16.mxu0 0
    %1252 = vmatpush1.bf16.msra.mxu0 %v1208
    %1253 = vmatprep.subr.bf16.mxu0 0
    %1254 = vmatpush1.bf16.msra.mxu0 %v1209
    %1255 = vmatprep.subr.bf16.mxu0 0
    %1256 = vmatpush1.bf16.msra.mxu0 %v1210
    %1257 = vmatprep.subr.bf16.mxu0 0
    %1258 = vmatpush1.bf16.msra.mxu0 %v1211
    %1259 = vmatprep.subr.bf16.mxu0 0
    %1260 = vmatpush1.bf16.msra.mxu0 %v1212
    %1261 = vmatprep.mubr.bf16.mxu0 %v1100
    %1262 = vmatmul.mubr.bf16.gmra.mrb[0].mxu0 %v1099
    %v1263 = vpop.f32.mrb[0].mxu0
    %v1264 = vadd.f32 0.0, %v1263
    %v1265 = vpop.f32.mrb[0].mxu0
    %v1266 = vpop.f32.mrb[0].mxu0
    %v1267 = vpop.f32.mrb[0].mxu0
    %1268 = vdwg.mxu0
    %s1269 = scalar_lea.vmem [#allocation22], 8
    %1270 = vst [vmem:[%s1269] sm:$0xff] %v1264
    %s1271 = scalar_lea.vmem [#allocation19], 256
    %v1272 = vld [vmem:[%s1271] sm:$0xff]
    %v1273 = vld [vmem:[%s1271 + $0x8] sm:$0xff]
    %v1274 = vld [vmem:[%s1271 + $0x10] sm:$0xff]
    %v1275 = vld [vmem:[%s1271 + $0x18] sm:$0xff]
    %v1276 = vld [vmem:[%s1271 + $0x20] sm:$0xff]
    %v1277 = vld [vmem:[%s1271 + $0x28] sm:$0xff]
    %v1278 = vld [vmem:[%s1271 + $0x30] sm:$0xff]
    %v1279 = vld [vmem:[%s1271 + $0x38] sm:$0xff]
    %v1280 = vld [vmem:[%s1271 + $0x40] sm:$0xff]
    %v1281 = vld [vmem:[%s1271 + $0x48] sm:$0xff]
    %v1282 = vld [vmem:[%s1271 + $0x50] sm:$0xff]
    %v1283 = vld [vmem:[%s1271 + $0x58] sm:$0xff]
    %v1284 = vld [vmem:[%s1271 + $0x60] sm:$0xff]
    %v1285 = vld [vmem:[%s1271 + $0x68] sm:$0xff]
    %v1286 = vld [vmem:[%s1271 + $0x70] sm:$0xff]
    %v1287 = vld [vmem:[%s1271 + $0x78] sm:$0xff]
    %v1304 = vunpack.c.l.b16 %v1272
    %v1305 = vunpack.c.h.b16 %v1272
    %v1306 = vunpack.c.l.b16 %v1273
    %v1307 = vunpack.c.h.b16 %v1273
    %v1308 = vunpack.c.l.b16 %v1274
    %v1309 = vunpack.c.h.b16 %v1274
    %v1310 = vunpack.c.l.b16 %v1275
    %v1311 = vunpack.c.h.b16 %v1275
    %v1312 = vunpack.c.l.b16 %v1276
    %v1313 = vunpack.c.h.b16 %v1276
    %v1314 = vunpack.c.l.b16 %v1277
    %v1315 = vunpack.c.h.b16 %v1277
    %v1316 = vunpack.c.l.b16 %v1278
    %v1317 = vunpack.c.h.b16 %v1278
    %v1318 = vunpack.c.l.b16 %v1279
    %v1319 = vunpack.c.h.b16 %v1279
    %v1320 = vunpack.c.l.b16 %v1280
    %v1321 = vunpack.c.h.b16 %v1280
    %v1322 = vunpack.c.l.b16 %v1281
    %v1323 = vunpack.c.h.b16 %v1281
    %v1324 = vunpack.c.l.b16 %v1282
    %v1325 = vunpack.c.h.b16 %v1282
    %v1326 = vunpack.c.l.b16 %v1283
    %v1327 = vunpack.c.h.b16 %v1283
    %v1328 = vunpack.c.l.b16 %v1284
    %v1329 = vunpack.c.h.b16 %v1284
    %v1330 = vunpack.c.l.b16 %v1285
    %v1331 = vunpack.c.h.b16 %v1285
    %v1332 = vunpack.c.l.b16 %v1286
    %v1333 = vunpack.c.h.b16 %v1286
    %v1334 = vunpack.c.l.b16 %v1287
    %v1335 = vunpack.c.h.b16 %v1287
    %v1336 = vpack.c.b16 %v1306, %v1304
    %v1337 = vpack.c.b16 %v1307, %v1305
    %v1338 = vpack.c.b16 %v1310, %v1308
    %v1339 = vpack.c.b16 %v1311, %v1309
    %v1340 = vpack.c.b16 %v1314, %v1312
    %v1341 = vpack.c.b16 %v1315, %v1313
    %v1342 = vpack.c.b16 %v1318, %v1316
    %v1343 = vpack.c.b16 %v1319, %v1317
    %v1344 = vpack.c.b16 %v1322, %v1320
    %v1345 = vpack.c.b16 %v1323, %v1321
    %v1346 = vpack.c.b16 %v1326, %v1324
    %v1347 = vpack.c.b16 %v1327, %v1325
    %v1348 = vpack.c.b16 %v1330, %v1328
    %v1349 = vpack.c.b16 %v1331, %v1329
    %v1350 = vpack.c.b16 %v1334, %v1332
    %v1351 = vpack.c.b16 %v1335, %v1333
    %1368 = vmatprep.subr.bf16.mxu0 %v1337
    %1369 = vmatpush1.bf16.msra.mxu0 %v1336
    %1370 = vmatprep.subr.bf16.mxu0 %v1339
    %1371 = vmatpush1.bf16.msra.mxu0 %v1338
    %1372 = vmatprep.subr.bf16.mxu0 %v1341
    %1373 = vmatpush1.bf16.msra.mxu0 %v1340
    %1374 = vmatprep.subr.bf16.mxu0 %v1343
    %1375 = vmatpush1.bf16.msra.mxu0 %v1342
    %1376 = vmatprep.subr.bf16.mxu0 %v1345
    %1377 = vmatpush1.bf16.msra.mxu0 %v1344
    %1378 = vmatprep.subr.bf16.mxu0 %v1347
    %1379 = vmatpush1.bf16.msra.mxu0 %v1346
    %1380 = vmatprep.subr.bf16.mxu0 %v1349
    %1381 = vmatpush1.bf16.msra.mxu0 %v1348
    %1382 = vmatprep.subr.bf16.mxu0 %v1351
    %1383 = vmatpush1.bf16.msra.mxu0 %v1350
    %1384 = vmatprep.subr.bf16.mxu0 0
    %1385 = vmatpush1.bf16.msra.mxu0 0
    %1386 = vmatprep.subr.bf16.mxu0 0
    %1387 = vmatpush1.bf16.msra.mxu0 0
    %1388 = vmatprep.subr.bf16.mxu0 0
    %1389 = vmatpush1.bf16.msra.mxu0 0
    %1390 = vmatprep.subr.bf16.mxu0 0
    %1391 = vmatpush1.bf16.msra.mxu0 0
    %1392 = vmatprep.subr.bf16.mxu0 0
    %1393 = vmatpush1.bf16.msra.mxu0 0
    %1394 = vmatprep.subr.bf16.mxu0 0
    %1395 = vmatpush1.bf16.msra.mxu0 0
    %1396 = vmatprep.subr.bf16.mxu0 0
    %1397 = vmatpush1.bf16.msra.mxu0 0
    %1398 = vmatprep.subr.bf16.mxu0 0
    %1399 = vmatpush1.bf16.msra.mxu0 0
    %1400 = vmatprep.mubr.bf16.mxu0 0
    %1401 = vmatmul.mubr.bf16.gmra.mrb[0].mxu0 %v648
    %v1402 = vpop.f32.mrb[0].mxu0
    %v1403 = vadd.f32 0.0, %v1402
    %v1404 = vpop.f32.mrb[0].mxu0
    %v1405 = vadd.f32 0.0, %v1404
    %v1406 = vpop.f32.mrb[0].mxu0
    %v1407 = vpop.f32.mrb[0].mxu0
    %1408 = vdwg.mxu0
    %v1409 = vmul.f32 %v1403, %v566
    %v1410 = vmul.f32 %v1405, %v568
    %v1411 = vpack.c.bf16 %v1409, %v1409
    %v1412 = vpack.c.bf16 %v1410, %v1410
    %v1413 = vld [vmem:[#allocation20] sm:$0xf]
    %v1414 = vld [vmem:[#allocation20 + $0x4] sm:$0xf]
    %v1415 = vld [vmem:[#allocation20 + $0x8] sm:$0xf]
    %v1416 = vld [vmem:[#allocation20 + $0xc] sm:$0xf]
    %v1417 = vld [vmem:[#allocation20 + $0x10] sm:$0xf]
    %v1418 = vld [vmem:[#allocation20 + $0x14] sm:$0xf]
    %v1419 = vld [vmem:[#allocation20 + $0x18] sm:$0xf]
    %v1420 = vld [vmem:[#allocation20 + $0x1c] sm:$0xf]
    %v1421 = vld [vmem:[#allocation20 + $0x20] sm:$0xf]
    %v1422 = vld [vmem:[#allocation20 + $0x24] sm:$0xf]
    %v1423 = vld [vmem:[#allocation20 + $0x28] sm:$0xf]
    %v1424 = vld [vmem:[#allocation20 + $0x2c] sm:$0xf]
    %v1425 = vld [vmem:[#allocation20 + $0x30] sm:$0xf]
    %v1426 = vld [vmem:[#allocation20 + $0x34] sm:$0xf]
    %v1427 = vld [vmem:[#allocation20 + $0x38] sm:$0xf]
    %v1428 = vld [vmem:[#allocation20 + $0x3c] sm:$0xf]
    %v1429 = vld [vmem:[#allocation20 + $0x40] sm:$0xf]
    %v1430 = vld [vmem:[#allocation20 + $0x44] sm:$0xf]
    %v1431 = vld [vmem:[#allocation20 + $0x48] sm:$0xf]
    %v1432 = vld [vmem:[#allocation20 + $0x4c] sm:$0xf]
    %v1433 = vld [vmem:[#allocation20 + $0x50] sm:$0xf]
    %v1434 = vld [vmem:[#allocation20 + $0x54] sm:$0xf]
    %v1435 = vld [vmem:[#allocation20 + $0x58] sm:$0xf]
    %v1436 = vld [vmem:[#allocation20 + $0x5c] sm:$0xf]
    %v1437 = vld [vmem:[#allocation20 + $0x60] sm:$0xf]
    %v1438 = vld [vmem:[#allocation20 + $0x64] sm:$0xf]
    %v1439 = vld [vmem:[#allocation20 + $0x68] sm:$0xf]
    %v1440 = vld [vmem:[#allocation20 + $0x6c] sm:$0xf]
    %v1441 = vld [vmem:[#allocation20 + $0x70] sm:$0xf]
    %v1442 = vld [vmem:[#allocation20 + $0x74] sm:$0xf]
    %v1443 = vld [vmem:[#allocation20 + $0x78] sm:$0xf]
    %v1444 = vld [vmem:[#allocation20 + $0x7c] sm:$0xf]
    %v1477 = vunpack.c.l.b16 %v1413
    %v1478 = vunpack.c.l.b16 %v1414
    %v1479 = vunpack.c.l.b16 %v1415
    %v1480 = vunpack.c.l.b16 %v1416
    %v1481 = vunpack.c.l.b16 %v1417
    %v1482 = vunpack.c.l.b16 %v1418
    %v1483 = vunpack.c.l.b16 %v1419
    %v1484 = vunpack.c.l.b16 %v1420
    %v1485 = vunpack.c.l.b16 %v1421
    %v1486 = vunpack.c.l.b16 %v1422
    %v1487 = vunpack.c.l.b16 %v1423
    %v1488 = vunpack.c.l.b16 %v1424
    %v1489 = vunpack.c.l.b16 %v1425
    %v1490 = vunpack.c.l.b16 %v1426
    %v1491 = vunpack.c.l.b16 %v1427
    %v1492 = vunpack.c.l.b16 %v1428
    %v1493 = vunpack.c.l.b16 %v1429
    %v1494 = vunpack.c.l.b16 %v1430
    %v1495 = vunpack.c.l.b16 %v1431
    %v1496 = vunpack.c.l.b16 %v1432
    %v1497 = vunpack.c.l.b16 %v1433
    %v1498 = vunpack.c.l.b16 %v1434
    %v1499 = vunpack.c.l.b16 %v1435
    %v1500 = vunpack.c.l.b16 %v1436
    %v1501 = vunpack.c.l.b16 %v1437
    %v1502 = vunpack.c.l.b16 %v1438
    %v1503 = vunpack.c.l.b16 %v1439
    %v1504 = vunpack.c.l.b16 %v1440
    %v1505 = vunpack.c.l.b16 %v1441
    %v1506 = vunpack.c.l.b16 %v1442
    %v1507 = vunpack.c.l.b16 %v1443
    %v1508 = vunpack.c.l.b16 %v1444
    %v1509 = vpack.c.b16 %v1478, %v1477
    %v1510 = vpack.c.b16 %v1480, %v1479
    %v1511 = vpack.c.b16 %v1482, %v1481
    %v1512 = vpack.c.b16 %v1484, %v1483
    %v1513 = vpack.c.b16 %v1486, %v1485
    %v1514 = vpack.c.b16 %v1488, %v1487
    %v1515 = vpack.c.b16 %v1490, %v1489
    %v1516 = vpack.c.b16 %v1492, %v1491
    %v1517 = vpack.c.b16 %v1494, %v1493
    %v1518 = vpack.c.b16 %v1496, %v1495
    %v1519 = vpack.c.b16 %v1498, %v1497
    %v1520 = vpack.c.b16 %v1500, %v1499
    %v1521 = vpack.c.b16 %v1502, %v1501
    %v1522 = vpack.c.b16 %v1504, %v1503
    %v1523 = vpack.c.b16 %v1506, %v1505
    %v1524 = vpack.c.b16 %v1508, %v1507
    %1541 = vmatprep.subr.bf16.mxu0 0
    %1542 = vmatpush1.bf16.msra.mxu0 %v1509
    %1543 = vmatprep.subr.bf16.mxu0 0
    %1544 = vmatpush1.bf16.msra.mxu0 %v1510
    %1545 = vmatprep.subr.bf16.mxu0 0
    %1546 = vmatpush1.bf16.msra.mxu0 %v1511
    %1547 = vmatprep.subr.bf16.mxu0 0
    %1548 = vmatpush1.bf16.msra.mxu0 %v1512
    %1549 = vmatprep.subr.bf16.mxu0 0
    %1550 = vmatpush1.bf16.msra.mxu0 %v1513
    %1551 = vmatprep.subr.bf16.mxu0 0
    %1552 = vmatpush1.bf16.msra.mxu0 %v1514
    %1553 = vmatprep.subr.bf16.mxu0 0
    %1554 = vmatpush1.bf16.msra.mxu0 %v1515
    %1555 = vmatprep.subr.bf16.mxu0 0
    %1556 = vmatpush1.bf16.msra.mxu0 %v1516
    %1557 = vmatprep.subr.bf16.mxu0 0
    %1558 = vmatpush1.bf16.msra.mxu0 %v1517
    %1559 = vmatprep.subr.bf16.mxu0 0
    %1560 = vmatpush1.bf16.msra.mxu0 %v1518
    %1561 = vmatprep.subr.bf16.mxu0 0
    %1562 = vmatpush1.bf16.msra.mxu0 %v1519
    %1563 = vmatprep.subr.bf16.mxu0 0
    %1564 = vmatpush1.bf16.msra.mxu0 %v1520
    %1565 = vmatprep.subr.bf16.mxu0 0
    %1566 = vmatpush1.bf16.msra.mxu0 %v1521
    %1567 = vmatprep.subr.bf16.mxu0 0
    %1568 = vmatpush1.bf16.msra.mxu0 %v1522
    %1569 = vmatprep.subr.bf16.mxu0 0
    %1570 = vmatpush1.bf16.msra.mxu0 %v1523
    %1571 = vmatprep.subr.bf16.mxu0 0
    %1572 = vmatpush1.bf16.msra.mxu0 %v1524
    %1573 = vmatprep.mubr.bf16.mxu0 %v1412
    %1574 = vmatmul.mubr.bf16.gmra.mrb[0].mxu0 %v1411
    %v1575 = vpop.f32.mrb[0].mxu0
    %v1576 = vadd.f32 0.0, %v1575
    %v1577 = vpop.f32.mrb[0].mxu0
    %v1578 = vpop.f32.mrb[0].mxu0
    %v1579 = vpop.f32.mrb[0].mxu0
    %1580 = vdwg.mxu0
    %s1581 = scalar_lea.vmem [#allocation22], 16
    %1582 = vst [vmem:[%s1581] sm:$0xff] %v1576
    // Predicated region
    $region98: #{tpu_custom_call.1} parent=1 // pred_check
      _
    $region99: #{tpu_custom_call.1} parent=1 // pred_check_branch
      %1584 = sbr.rel (0) target = $region101
    $region100: #{tpu_custom_call.1} parent=1 // pred_region
      %s1586 = ssub.s32 384, 384
      %1587 = vsyncadd [#allocation4], %s1586
      %s1588 = sshll.u32 [#allocation22], 4
      %s1589 = int_to_ptr.vmem [resolvable:$true] %s1588
      %1594 = dma.vmem_to_hbm [thread:$0]  %s1589, 384, %s12, [#allocation4], 128, 128, 8
    $region101: #{tpu_custom_call.1} parent=1 // pred_fallthru
      _
    // Predicated region
    $region102: #{tpu_custom_call.1} parent=1 // pred_check
      _
    $region103: #{tpu_custom_call.1} parent=1 // pred_check_branch
      %1596 = sbr.rel (0) target = $region105
    $region104: #{tpu_custom_call.1} parent=1 // pred_region
      %1597 = dma.done [#allocation4], 384
    $region105: #{tpu_custom_call.1} parent=1 // pred_fallthru
      _
    %1598 = vsyncpa [#allocation3], 1
    %1599 = vsyncpa [#allocation6], 1
    %1600 = vsyncpa [#allocation9], 1
    %1601 = vsyncpa [#allocation12], 1
    %1602 = vsyncpa [#allocation15], 1
    %1603 = vsyncpa [#allocation18], 1
    %1604 = vsyncpa [#allocation21], 1
    %1605 = vsyncpa [#allocation4], 1

</llo_original>
